<compile_context>
chip_gen: v6e
topology: v6e:2x2x1
jax: 0.10.0
libtpu: 0.0.40
codegen_flags: <defaults>
</compile_context>

<pallas_src>
import functools

import jax
import jax.numpy as jnp
from jax.experimental import pallas as pl
from jax.experimental.pallas import tpu as pltpu


def _round_up(x, m):
    return ((x + m - 1) // m) * m


# --------------------------------------------------------------------------------------
# Kernel
# --------------------------------------------------------------------------------------
def _mlp_kernel(num_layers, d_out, has_cat, compute_dtype, *refs):
    """Fused [concat ->] (Linear -> ReLU)*L -> head Linear for one batch tile.

    refs layout:
      has_cat:  x_num, x_cat, w0_num, w0_cat, b0, (w_i, b_i)*, head_w, head_b, out
      no cat:   x_num,        w0,             b0, (w_i, b_i)*, head_w, head_b, out
    Weights arrive pre-cast to compute_dtype, biases pre-cast to f32 (prepare_params).
    """
    out_ref = refs[-1]
    it = iter(refs[:-1])

    x_num = next(it)[...]
    if has_cat:
        x_cat = next(it)[...]
        w0n = next(it)[...]
        w0c = next(it)[...]
        b0 = next(it)[...]
        # Concat fused into the first matmul: [x_num|x_cat] @ W0 == x_num@W0n + x_cat@W0c.
        h = (jnp.dot(x_num.astype(compute_dtype), w0n, preferred_element_type=jnp.float32)
             + jnp.dot(x_cat.astype(compute_dtype), w0c, preferred_element_type=jnp.float32)
             + b0)
    else:
        w0 = next(it)[...]
        b0 = next(it)[...]
        h = (jnp.dot(x_num.astype(compute_dtype), w0, preferred_element_type=jnp.float32)
             + b0)
    h = jnp.maximum(h, 0.0)
    # TODO(synk): training-mode dropout (pltpu.prng_* masking) not implemented; eval-mode
    #             F.dropout is the identity, so nothing to do for inference.

    for _ in range(num_layers - 1):
        w = next(it)[...]
        b = next(it)[...]
        h = jnp.maximum(
            jnp.dot(h.astype(compute_dtype), w, preferred_element_type=jnp.float32) + b,
            0.0)

    head_w = next(it)[...]
    head_b = next(it)[...]
    if d_out == 1:
        # head_w is a pre-transposed f32 (1, d_layers) row: VPU multiply + XLU lane
        # reduction (frees one MXU pass), stored lane-dense as a (1, tm) row so the
        # store is an unmasked vst instead of a masked 1-of-128-lane vst.msk.
        logit = jnp.sum(h * head_w, axis=-1, keepdims=True) + head_b          # (tm, 1)
        out_ref[...] = logit.reshape(1, -1).astype(out_ref.dtype)             # (1, tm)
    else:
        logit = (jnp.dot(h.astype(compute_dtype), head_w,
                         preferred_element_type=jnp.float32) + head_b)
        out_ref[...] = logit.astype(out_ref.dtype)


# --------------------------------------------------------------------------------------
# Parameter init (PyTorch nn.Linear style) and one-time preparation
# --------------------------------------------------------------------------------------
def init_mlp_params(key, d_in, d_layers, num_layers, d_out):
    """Deterministic PyTorch-style (uniform +/- 1/sqrt(fan_in)) initialization."""
    dims = [(d_in, d_layers)] + [(d_layers, d_layers) for _ in range(num_layers - 1)]
    params = []
    for (fi, fo) in dims:
        key, kw, kb = jax.random.split(key, 3)
        bound = 1.0 / jnp.sqrt(fi)
        w = jax.random.uniform(kw, (fi, fo), jnp.float32, -bound, bound)
        b = jax.random.uniform(kb, (1, fo), jnp.float32, -bound, bound)
        params.append((w, b))
    key, kw, kb = jax.random.split(key, 3)
    bound = 1.0 / jnp.sqrt(d_layers)
    head_w = jax.random.uniform(kw, (d_layers, d_out), jnp.float32, -bound, bound)
    head_b = jax.random.uniform(kb, (1, d_out), jnp.float32, -bound, bound)
    params.append((head_w, head_b))
    return params


def prepare_params(params, d_num, has_cat, d_out, compute_dtype=jnp.bfloat16):
    """One-time preprocessing (do NOT call per forward):
      * split W0 rows into numeric / categorical halves for the fused concat,
      * cast weights to compute_dtype, biases to f32,
      * for d_out == 1: pre-transpose head_w to an f32 (1, d_layers) row.
    Returns the flat list of arrays fed straight to pallas_call.
    """
    prepared = []
    w0, b0 = params[0]
    if has_cat:
        prepared.append(jnp.asarray(w0[:d_num], compute_dtype))
        prepared.append(jnp.asarray(w0[d_num:], compute_dtype))
    else:
        prepared.append(jnp.asarray(w0, compute_dtype))
    prepared.append(jnp.asarray(b0, jnp.float32))
    for (w, b) in params[1:-1]:
        prepared.append(jnp.asarray(w, compute_dtype))
        prepared.append(jnp.asarray(b, jnp.float32))
    head_w, head_b = params[-1]
    if d_out == 1:
        prepared.append(jnp.asarray(head_w.T, jnp.float32))   # (1, d_layers) f32 row
    else:
        prepared.append(jnp.asarray(head_w, compute_dtype))
    prepared.append(jnp.asarray(head_b, jnp.float32))
    return [jax.block_until_ready(p) for p in prepared]        # materialize once


# --------------------------------------------------------------------------------------
# Forward wrapper
# --------------------------------------------------------------------------------------
def mlp_forward(x_num, x_cat, prepared_params, num_layers, d_out, *,
                block_b=1024, compute_dtype=jnp.bfloat16, single_buffer_params=True):
    """Pallas-backed forward. prepared_params comes from prepare_params()."""
    B, d_num = x_num.shape
    has_cat = x_cat is not None
    d_cat = x_cat.shape[1] if has_cat else 0
    d_in = d_num + d_cat
    d_layers = prepared_params[0].shape[-1]

    # ---- batch tile selection ----------------------------------------------------
    # 256-row alignment (MXU-friendly on v6e/v7x, multiple of the 128 v5e wants);
    # for B > 256 force >= 2 grid steps so the DMA pipeline overlaps and v7x's two
    # TensorCores both get a share of the ("parallel",) batch axis.
    if B > 256:
        tm = min(block_b, _round_up(pl.cdiv(B, 2), 256))
    else:
        tm = _round_up(B, 8)
    n_tiles = pl.cdiv(B, tm)
    grid = (n_tiles,)

    args = [x_num] + ([x_cat] if has_cat else []) + list(prepared_params)

    # ---- output: lane-dense for d_out == 1 ----------------------------------------
    if d_out == 1:
        out_shape = jax.ShapeDtypeStruct((1, n_tiles * tm), jnp.float32)
        out_spec = pl.BlockSpec((1, tm), lambda i: (0, i))
    else:
        out_shape = jax.ShapeDtypeStruct((B, d_out), jnp.float32)
        out_spec = pl.BlockSpec((tm, d_out), lambda i: (i, 0))

    # ---- VMEM budget from actual footprint -----------------------------------------
    param_bytes = sum(int(p.size) * p.dtype.itemsize for p in prepared_params)
    x_row_bytes = d_num * x_num.dtype.itemsize + (d_cat * x_cat.dtype.itemsize if has_cat else 0)
    resident_param_bytes = param_bytes * (1 if single_buffer_params else 2)
    x_tile_bytes = 2 * tm * x_row_bytes                                   # double-buffered
    out_tile_bytes = 2 * (tm if d_out == 1 else tm * d_out) * 4
    interm_bytes = 2 * tm * max(d_in, d_layers) * 4                       # ~2 live f32 acts
    footprint = resident_param_bytes + x_tile_bytes + out_tile_bytes + interm_bytes
    try:
        vmem_cap = int(pltpu.get_tpu_info().vmem_capacity_bytes)
    except Exception:
        vmem_cap = 64 * 1024 * 1024                                       # v7x-safe fallback
    vmem_limit = min(max(2 * footprint + (2 << 20), 16 << 20), (vmem_cap * 3) // 4)
    vmem_limit = int(max(vmem_limit, footprint + (1 << 20)))
    # TODO(synk): if resident weights alone exceed ~40 MiB (big d_layers/num_layers),
    #             switch to streaming weights per layer (extra grid axis / emit_pipeline)
    #             instead of all-resident — not needed at these model sizes.

    # ---- advisory cost estimate -----------------------------------------------------
    flops = 2 * B * (d_in * d_layers
                     + (num_layers - 1) * d_layers * d_layers
                     + d_layers * d_out)
    bytes_accessed = B * x_row_bytes + B * d_out * 4 + param_bytes

    kernel_fn = functools.partial(_mlp_kernel, num_layers, d_out, has_cat, compute_dtype)

    def build_in_specs(single_buffer):
        specs = [pl.BlockSpec((tm, d_num), lambda i: (i, 0))]
        if has_cat:
            specs.append(pl.BlockSpec((tm, d_cat), lambda i: (i, 0)))
        for p in prepared_params:
            # Constant block index -> parameter stays resident in VMEM across grid
            # steps; Buffered(1) drops the useless second buffer.
            if single_buffer:
                specs.append(pl.BlockSpec(p.shape, lambda i: (0, 0),
                                          pipeline_mode=pl.Buffered(1)))
            else:
                specs.append(pl.BlockSpec(p.shape, lambda i: (0, 0)))
        return specs

    def run(single_buffer):
        return pl.pallas_call(
            kernel_fn,
            out_shape=out_shape,
            grid=grid,
            in_specs=build_in_specs(single_buffer),
            out_specs=out_spec,
            compiler_params=pltpu.CompilerParams(
                dimension_semantics=("parallel",),
                vmem_limit_bytes=vmem_limit),
            cost_estimate=pl.CostEstimate(
                flops=int(flops), transcendentals=0, bytes_accessed=int(bytes_accessed)),
        )(*args)

    if single_buffer_params:
        try:
            out = run(True)
        except Exception:
            # Some jax versions reject single-buffered resident inputs; fall back.
            out = run(False)
    else:
        out = run(False)

    if d_out == 1:
        out = jnp.squeeze(out[:, :B])   # (B,) like torch .squeeze(); scalar if B == 1
    return out


def mlp_forward_ref(x_num, x_cat, params, d_out):
    """Pure-JAX reference for correctness checking."""
    x = x_num if x_cat is None else jnp.concatenate([x_num, x_cat], axis=1)
    for (w, b) in params[:-1]:
        x = jnp.maximum(x @ w + b, 0.0)
    hw, hb = params[-1]
    out = x @ hw + hb
    if d_out == 1:
        out = jnp.squeeze(out)
    return out


# --------------------------------------------------------------------------------------
# Self-test
# --------------------------------------------------------------------------------------
if __name__ == "__main__":
    key = jax.random.PRNGKey(0)

    # ---- config 1: numeric + categorical features, d_out == 1 (lane-dense head) ----
    batch, d_in_num, d_in_cat, d_layers, num_layers, d_out = 96, 8, 8, 32, 2, 1
    key, k_num, k_cat, k_params = jax.random.split(key, 4)
    x_num = jax.random.normal(k_num, (batch, d_in_num), jnp.float32)
    x_cat = jax.random.normal(k_cat, (batch, d_in_cat), jnp.float32)
    params = init_mlp_params(k_params, d_in_num + d_in_cat, d_layers, num_layers, d_out)
    ref = mlp_forward_ref(x_num, x_cat, params, d_out)

    # Exact (f32-operand) path.
    prep_f32 = prepare_params(params, d_in_num, True, d_out, compute_dtype=jnp.float32)
    out_f32 = jax.block_until_ready(
        mlp_forward(x_num, x_cat, prep_f32, num_layers, d_out, compute_dtype=jnp.float32))
    assert out_f32.shape == ref.shape, (out_f32.shape, ref.shape)
    assert jnp.allclose(out_f32, ref, atol=1e-5, rtol=1e-5), "f32 path mismatch vs reference"

    # Fast bf16-operand path (MXU-native), f32 accumulation.
    prep_bf16 = prepare_params(params, d_in_num, True, d_out, compute_dtype=jnp.bfloat16)
    out_bf16 = jax.block_until_ready(
        mlp_forward(x_num, x_cat, prep_bf16, num_layers, d_out, compute_dtype=jnp.bfloat16))
    assert out_bf16.shape == ref.shape, (out_bf16.shape, ref.shape)
    assert jnp.allclose(out_bf16, ref, atol=3e-2, rtol=3e-2), "bf16 path mismatch vs reference"

    # ---- config 2: no categorical features, d_out > 1 (matmul head path) ----
    batch2, d_num2, d_layers2, num_layers2, d_out2 = 16, 12, 32, 3, 3
    key, k2x, k2p = jax.random.split(key, 3)
    x_num2 = jax.random.normal(k2x, (batch2, d_num2), jnp.float32)
    params2 = init_mlp_params(k2p, d_num2, d_layers2, num_layers2, d_out2)
    ref2 = mlp_forward_ref(x_num2, None, params2, d_out2)
    prep2 = prepare_params(params2, d_num2, False, d_out2, compute_dtype=jnp.float32)
    out2 = jax.block_until_ready(
        mlp_forward(x_num2, None, prep2, num_layers2, d_out2, compute_dtype=jnp.float32))
    assert out2.shape == ref2.shape, (out2.shape, ref2.shape)
    assert jnp.allclose(out2, ref2, atol=1e-5, rtol=1e-5), "no-cat path mismatch vs reference"

    # ---- config 3: larger batch -> multi-tile grid with a partial last tile ----
    batch3 = 600
    key, k3n, k3c, k3p = jax.random.split(key, 4)
    x_num3 = jax.random.normal(k3n, (batch3, d_in_num), jnp.float32)
    x_cat3 = jax.random.normal(k3c, (batch3, d_in_cat), jnp.float32)
    params3 = init_mlp_params(k3p, d_in_num + d_in_cat, d_layers, num_layers, 1)
    ref3 = mlp_forward_ref(x_num3, x_cat3, params3, 1)
    prep3 = prepare_params(params3, d_in_num, True, 1, compute_dtype=jnp.float32)
    out3 = jax.block_until_ready(
        mlp_forward(x_num3, x_cat3, prep3, num_layers, 1, compute_dtype=jnp.float32))
    assert out3.shape == ref3.shape, (out3.shape, ref3.shape)
    assert jnp.allclose(out3, ref3, atol=1e-5, rtol=1e-5), "multi-tile path mismatch vs reference"

    print("KERNEL_OK")
</pallas_src>

<mosaic_0001>
module attributes {stable_mosaic.version = 11 : i64} {
  func.func @_mlp_kernel(%arg0: i32, %arg1: memref<96x8xf32, #tpu.memory_space<vmem>>, %arg2: memref<96x8xf32, #tpu.memory_space<vmem>>, %arg3: memref<8x32xf32, #tpu.memory_space<vmem>>, %arg4: memref<8x32xf32, #tpu.memory_space<vmem>>, %arg5: memref<1x32xf32, #tpu.memory_space<vmem>>, %arg6: memref<32x32xf32, #tpu.memory_space<vmem>>, %arg7: memref<1x32xf32, #tpu.memory_space<vmem>>, %arg8: memref<1x32xf32, #tpu.memory_space<vmem>>, %arg9: memref<1x1xf32, #tpu.memory_space<vmem>>, %arg10: memref<1x96xf32, #tpu.memory_space<vmem>>) attributes {dimension_semantics = [#tpu.dimension_semantics<parallel>], iteration_bounds = array<i64: 1>, scalar_prefetch = 0 : i64, scratch_operands = 0 : i64, tpu.core_type = #tpu.core_type<tc>, window_params = [{transform_indices = @transform_0, window_bounds = array<i64: 96, 8>}, {transform_indices = @transform_1, window_bounds = array<i64: 96, 8>}, {pipeline_mode = #tpu.pipeline_mode<synchronous>, transform_indices = @transform_2, window_bounds = array<i64: 8, 32>}, {pipeline_mode = #tpu.pipeline_mode<synchronous>, transform_indices = @transform_3, window_bounds = array<i64: 8, 32>}, {pipeline_mode = #tpu.pipeline_mode<synchronous>, transform_indices = @transform_4, window_bounds = array<i64: 1, 32>}, {pipeline_mode = #tpu.pipeline_mode<synchronous>, transform_indices = @transform_5, window_bounds = array<i64: 32, 32>}, {pipeline_mode = #tpu.pipeline_mode<synchronous>, transform_indices = @transform_6, window_bounds = array<i64: 1, 32>}, {pipeline_mode = #tpu.pipeline_mode<synchronous>, transform_indices = @transform_7, window_bounds = array<i64: 1, 32>}, {pipeline_mode = #tpu.pipeline_mode<synchronous>, transform_indices = @transform_8, window_bounds = array<i64: 1, 1>}, {transform_indices = @transform_9, window_bounds = array<i64: 1, 96>}]} {
    %c0 = arith.constant 0 : index
    %c0_0 = arith.constant 0 : index
    %0 = vector.load %arg1[%c0, %c0_0] : memref<96x8xf32, #tpu.memory_space<vmem>>, vector<96x8xf32>
    %c0_1 = arith.constant 0 : index
    %c0_2 = arith.constant 0 : index
    %1 = vector.load %arg2[%c0_1, %c0_2] : memref<96x8xf32, #tpu.memory_space<vmem>>, vector<96x8xf32>
    %c0_3 = arith.constant 0 : index
    %c0_4 = arith.constant 0 : index
    %2 = vector.load %arg3[%c0_3, %c0_4] : memref<8x32xf32, #tpu.memory_space<vmem>>, vector<8x32xf32>
    %c0_5 = arith.constant 0 : index
    %c0_6 = arith.constant 0 : index
    %3 = vector.load %arg4[%c0_5, %c0_6] : memref<8x32xf32, #tpu.memory_space<vmem>>, vector<8x32xf32>
    %c0_7 = arith.constant 0 : index
    %c0_8 = arith.constant 0 : index
    %4 = vector.load %arg5[%c0_7, %c0_8] : memref<1x32xf32, #tpu.memory_space<vmem>>, vector<1x32xf32>
    %cst = arith.constant dense<0.000000e+00> : vector<96x32xf32>
    %5 = tpu.matmul %0, %2, %cst {dimension_numbers = #tpu.dot_dimension_numbers<[1], [0], [0], [1], [0, 0, 1, 1], [], []>} : vector<96x8xf32>, vector<8x32xf32>, vector<96x32xf32> -> vector<96x32xf32>
    %cst_9 = arith.constant dense<0.000000e+00> : vector<96x32xf32>
    %6 = tpu.matmul %1, %3, %cst_9 {dimension_numbers = #tpu.dot_dimension_numbers<[1], [0], [0], [1], [0, 0, 1, 1], [], []>} : vector<96x8xf32>, vector<8x32xf32>, vector<96x32xf32> -> vector<96x32xf32>
    %7 = arith.addf %5, %6 : vector<96x32xf32>
    %8 = vector.broadcast %4 : vector<1x32xf32> to vector<96x32xf32>
    %9 = arith.addf %7, %8 : vector<96x32xf32>
    %cst_10 = arith.constant 0.000000e+00 : f32
    %10 = vector.broadcast %cst_10 : f32 to vector<96x32xf32>
    %11 = arith.maximumf %9, %10 : vector<96x32xf32>
    %c0_11 = arith.constant 0 : index
    %c0_12 = arith.constant 0 : index
    %12 = vector.load %arg6[%c0_11, %c0_12] : memref<32x32xf32, #tpu.memory_space<vmem>>, vector<32x32xf32>
    %c0_13 = arith.constant 0 : index
    %c0_14 = arith.constant 0 : index
    %13 = vector.load %arg7[%c0_13, %c0_14] : memref<1x32xf32, #tpu.memory_space<vmem>>, vector<1x32xf32>
    %cst_15 = arith.constant dense<0.000000e+00> : vector<96x32xf32>
    %14 = tpu.matmul %11, %12, %cst_15 {dimension_numbers = #tpu.dot_dimension_numbers<[1], [0], [0], [1], [0, 0, 1, 1], [], []>} : vector<96x32xf32>, vector<32x32xf32>, vector<96x32xf32> -> vector<96x32xf32>
    %15 = vector.broadcast %13 : vector<1x32xf32> to vector<96x32xf32>
    %16 = arith.addf %14, %15 : vector<96x32xf32>
    %cst_16 = arith.constant 0.000000e+00 : f32
    %17 = vector.broadcast %cst_16 : f32 to vector<96x32xf32>
    %18 = arith.maximumf %16, %17 : vector<96x32xf32>
    %c0_17 = arith.constant 0 : index
    %c0_18 = arith.constant 0 : index
    %19 = vector.load %arg8[%c0_17, %c0_18] : memref<1x32xf32, #tpu.memory_space<vmem>>, vector<1x32xf32>
    %c0_19 = arith.constant 0 : index
    %c0_20 = arith.constant 0 : index
    %20 = vector.load %arg9[%c0_19, %c0_20] : memref<1x1xf32, #tpu.memory_space<vmem>>, vector<1x1xf32>
    %21 = vector.broadcast %19 : vector<1x32xf32> to vector<96x32xf32>
    %22 = arith.mulf %18, %21 : vector<96x32xf32>
    %cst_21 = arith.constant dense<0.000000e+00> : vector<96xf32>
    %23 = vector.multi_reduction <add>, %22, %cst_21 [1] : vector<96x32xf32> to vector<96xf32>
    %24 = vector.shape_cast %23 : vector<96xf32> to vector<96x1xf32>
    %25 = vector.broadcast %20 : vector<1x1xf32> to vector<96x1xf32>
    %26 = arith.addf %24, %25 : vector<96x1xf32>
    %27 = vector.shape_cast %26 : vector<96x1xf32> to vector<1x96xf32>
    %c0_22 = arith.constant 0 : index
    %c0_23 = arith.constant 0 : index
    %28 = vector.load %arg10[%c0_22, %c0_23] : memref<1x96xf32, #tpu.memory_space<vmem>>, vector<1x96xf32>
    tpu.vector_store %arg10[%c0_22, %c0_23], %27 {strides = array<i32>} : memref<1x96xf32, #tpu.memory_space<vmem>>, vector<1x96xf32>,
    return
  }
  func.func @transform_0(%arg0: i32) -> (i32, i32) {
    %c0_i32 = arith.constant 0 : i32
    %c0_i32_0 = arith.constant 0 : i32
    return %arg0, %c0_i32 : i32, i32
  }
  func.func @transform_1(%arg0: i32) -> (i32, i32) {
    %c0_i32 = arith.constant 0 : i32
    %c0_i32_0 = arith.constant 0 : i32
    return %arg0, %c0_i32 : i32, i32
  }
  func.func @transform_2(%arg0: i32) -> (i32, i32) {
    %c0_i32 = arith.constant 0 : i32
    %c0_i32_0 = arith.constant 0 : i32
    %c0_i32_1 = arith.constant 0 : i32
    return %c0_i32, %c0_i32_0 : i32, i32
  }
  func.func @transform_3(%arg0: i32) -> (i32, i32) {
    %c0_i32 = arith.constant 0 : i32
    %c0_i32_0 = arith.constant 0 : i32
    %c0_i32_1 = arith.constant 0 : i32
    return %c0_i32, %c0_i32_0 : i32, i32
  }
  func.func @transform_4(%arg0: i32) -> (i32, i32) {
    %c0_i32 = arith.constant 0 : i32
    %c0_i32_0 = arith.constant 0 : i32
    %c0_i32_1 = arith.constant 0 : i32
    return %c0_i32, %c0_i32_0 : i32, i32
  }
  func.func @transform_5(%arg0: i32) -> (i32, i32) {
    %c0_i32 = arith.constant 0 : i32
    %c0_i32_0 = arith.constant 0 : i32
    %c0_i32_1 = arith.constant 0 : i32
    return %c0_i32, %c0_i32_0 : i32, i32
  }
  func.func @transform_6(%arg0: i32) -> (i32, i32) {
    %c0_i32 = arith.constant 0 : i32
    %c0_i32_0 = arith.constant 0 : i32
    %c0_i32_1 = arith.constant 0 : i32
    return %c0_i32, %c0_i32_0 : i32, i32
  }
  func.func @transform_7(%arg0: i32) -> (i32, i32) {
    %c0_i32 = arith.constant 0 : i32
    %c0_i32_0 = arith.constant 0 : i32
    %c0_i32_1 = arith.constant 0 : i32
    return %c0_i32, %c0_i32_0 : i32, i32
  }
  func.func @transform_8(%arg0: i32) -> (i32, i32) {
    %c0_i32 = arith.constant 0 : i32
    %c0_i32_0 = arith.constant 0 : i32
    %c0_i32_1 = arith.constant 0 : i32
    return %c0_i32, %c0_i32_0 : i32, i32
  }
  func.func @transform_9(%arg0: i32) -> (i32, i32) {
    %c0_i32 = arith.constant 0 : i32
    %c0_i32_0 = arith.constant 0 : i32
    return %c0_i32, %arg0 : i32, i32
  }
}

module attributes {stable_mosaic.version = 11 : i64} {
  func.func @_mlp_kernel(%arg0: i32, %arg1: memref<96x8xf32, #tpu.memory_space<vmem>>, %arg2: memref<96x8xf32, #tpu.memory_space<vmem>>, %arg3: memref<8x32xf32, #tpu.memory_space<vmem>>, %arg4: memref<8x32xf32, #tpu.memory_space<vmem>>, %arg5: memref<1x32xf32, #tpu.memory_space<vmem>>, %arg6: memref<32x32xf32, #tpu.memory_space<vmem>>, %arg7: memref<1x32xf32, #tpu.memory_space<vmem>>, %arg8: memref<1x32xf32, #tpu.memory_space<vmem>>, %arg9: memref<1x1xf32, #tpu.memory_space<vmem>>, %arg10: memref<1x96xf32, #tpu.memory_space<vmem>>) attributes {dimension_semantics = [#tpu.dimension_semantics<parallel>], iteration_bounds = array<i64: 1>, scalar_prefetch = 0 : i64, scratch_operands = 0 : i64, tpu.core_type = #tpu.core_type<tc>, window_params = [{transform_indices = @transform_0, window_bounds = array<i64: 96, 8>}, {transform_indices = @transform_1, window_bounds = array<i64: 96, 8>}, {pipeline_mode = #tpu.pipeline_mode<synchronous>, transform_indices = @transform_2, window_bounds = array<i64: 8, 32>}, {pipeline_mode = #tpu.pipeline_mode<synchronous>, transform_indices = @transform_3, window_bounds = array<i64: 8, 32>}, {pipeline_mode = #tpu.pipeline_mode<synchronous>, transform_indices = @transform_4, window_bounds = array<i64: 1, 32>}, {pipeline_mode = #tpu.pipeline_mode<synchronous>, transform_indices = @transform_5, window_bounds = array<i64: 32, 32>}, {pipeline_mode = #tpu.pipeline_mode<synchronous>, transform_indices = @transform_6, window_bounds = array<i64: 1, 32>}, {pipeline_mode = #tpu.pipeline_mode<synchronous>, transform_indices = @transform_7, window_bounds = array<i64: 1, 32>}, {pipeline_mode = #tpu.pipeline_mode<synchronous>, transform_indices = @transform_8, window_bounds = array<i64: 1, 1>}, {transform_indices = @transform_9, window_bounds = array<i64: 1, 96>}]} {
    %c0 = arith.constant 0 : index
    %c0_0 = arith.constant 0 : index
    %0 = vector.load %arg1[%c0, %c0_0] : memref<96x8xf32, #tpu.memory_space<vmem>>, vector<96x8xf32>
    %c0_1 = arith.constant 0 : index
    %c0_2 = arith.constant 0 : index
    %1 = vector.load %arg2[%c0_1, %c0_2] : memref<96x8xf32, #tpu.memory_space<vmem>>, vector<96x8xf32>
    %c0_3 = arith.constant 0 : index
    %c0_4 = arith.constant 0 : index
    %2 = vector.load %arg3[%c0_3, %c0_4] : memref<8x32xf32, #tpu.memory_space<vmem>>, vector<8x32xf32>
    %c0_5 = arith.constant 0 : index
    %c0_6 = arith.constant 0 : index
    %3 = vector.load %arg4[%c0_5, %c0_6] : memref<8x32xf32, #tpu.memory_space<vmem>>, vector<8x32xf32>
    %c0_7 = arith.constant 0 : index
    %c0_8 = arith.constant 0 : index
    %4 = vector.load %arg5[%c0_7, %c0_8] : memref<1x32xf32, #tpu.memory_space<vmem>>, vector<1x32xf32>
    %cst = arith.constant dense<0.000000e+00> : vector<96x32xf32>
    %5 = tpu.matmul %0, %2, %cst {dimension_numbers = #tpu.dot_dimension_numbers<[1], [0], [0], [1], [0, 0, 1, 1], [], []>} : vector<96x8xf32>, vector<8x32xf32>, vector<96x32xf32> -> vector<96x32xf32>
    %cst_9 = arith.constant dense<0.000000e+00> : vector<96x32xf32>
    %6 = tpu.matmul %1, %3, %cst_9 {dimension_numbers = #tpu.dot_dimension_numbers<[1], [0], [0], [1], [0, 0, 1, 1], [], []>} : vector<96x8xf32>, vector<8x32xf32>, vector<96x32xf32> -> vector<96x32xf32>
    %7 = arith.addf %5, %6 : vector<96x32xf32>
    %8 = vector.broadcast %4 : vector<1x32xf32> to vector<96x32xf32>
    %9 = arith.addf %7, %8 : vector<96x32xf32>
    %cst_10 = arith.constant 0.000000e+00 : f32
    %10 = vector.broadcast %cst_10 : f32 to vector<96x32xf32>
    %11 = arith.maximumf %9, %10 : vector<96x32xf32>
    %c0_11 = arith.constant 0 : index
    %c0_12 = arith.constant 0 : index
    %12 = vector.load %arg6[%c0_11, %c0_12] : memref<32x32xf32, #tpu.memory_space<vmem>>, vector<32x32xf32>
    %c0_13 = arith.constant 0 : index
    %c0_14 = arith.constant 0 : index
    %13 = vector.load %arg7[%c0_13, %c0_14] : memref<1x32xf32, #tpu.memory_space<vmem>>, vector<1x32xf32>
    %cst_15 = arith.constant dense<0.000000e+00> : vector<96x32xf32>
    %14 = tpu.matmul %11, %12, %cst_15 {dimension_numbers = #tpu.dot_dimension_numbers<[1], [0], [0], [1], [0, 0, 1, 1], [], []>} : vector<96x32xf32>, vector<32x32xf32>, vector<96x32xf32> -> vector<96x32xf32>
    %15 = vector.broadcast %13 : vector<1x32xf32> to vector<96x32xf32>
    %16 = arith.addf %14, %15 : vector<96x32xf32>
    %cst_16 = arith.constant 0.000000e+00 : f32
    %17 = vector.broadcast %cst_16 : f32 to vector<96x32xf32>
    %18 = arith.maximumf %16, %17 : vector<96x32xf32>
    %c0_17 = arith.constant 0 : index
    %c0_18 = arith.constant 0 : index
    %19 = vector.load %arg8[%c0_17, %c0_18] : memref<1x32xf32, #tpu.memory_space<vmem>>, vector<1x32xf32>
    %c0_19 = arith.constant 0 : index
    %c0_20 = arith.constant 0 : index
    %20 = vector.load %arg9[%c0_19, %c0_20] : memref<1x1xf32, #tpu.memory_space<vmem>>, vector<1x1xf32>
    %21 = vector.broadcast %19 : vector<1x32xf32> to vector<96x32xf32>
    %22 = arith.mulf %18, %21 : vector<96x32xf32>
    %cst_21 = arith.constant dense<0.000000e+00> : vector<96xf32>
    %23 = vector.multi_reduction <add>, %22, %cst_21 [1] : vector<96x32xf32> to vector<96xf32>
    %24 = vector.shape_cast %23 : vector<96xf32> to vector<96x1xf32>
    %25 = vector.broadcast %20 : vector<1x1xf32> to vector<96x1xf32>
    %26 = arith.addf %24, %25 : vector<96x1xf32>
    %27 = vector.shape_cast %26 : vector<96x1xf32> to vector<1x96xf32>
    %c0_22 = arith.constant 0 : index
    %c0_23 = arith.constant 0 : index
    %28 = vector.load %arg10[%c0_22, %c0_23] : memref<1x96xf32, #tpu.memory_space<vmem>>, vector<1x96xf32>
    tpu.vector_store %arg10[%c0_22, %c0_23], %27 {strides = array<i32>} : memref<1x96xf32, #tpu.memory_space<vmem>>, vector<1x96xf32>,
    return
  }
  func.func @transform_0(%arg0: i32) -> (i32, i32) {
    %c0_i32 = arith.constant 0 : i32
    %c0_i32_0 = arith.constant 0 : i32
    return %arg0, %c0_i32 : i32, i32
  }
  func.func @transform_1(%arg0: i32) -> (i32, i32) {
    %c0_i32 = arith.constant 0 : i32
    %c0_i32_0 = arith.constant 0 : i32
    return %arg0, %c0_i32 : i32, i32
  }
  func.func @transform_2(%arg0: i32) -> (i32, i32) {
    %c0_i32 = arith.constant 0 : i32
    %c0_i32_0 = arith.constant 0 : i32
    %c0_i32_1 = arith.constant 0 : i32
    return %c0_i32, %c0_i32_0 : i32, i32
  }
  func.func @transform_3(%arg0: i32) -> (i32, i32) {
    %c0_i32 = arith.constant 0 : i32
    %c0_i32_0 = arith.constant 0 : i32
    %c0_i32_1 = arith.constant 0 : i32
    return %c0_i32, %c0_i32_0 : i32, i32
  }
  func.func @transform_4(%arg0: i32) -> (i32, i32) {
    %c0_i32 = arith.constant 0 : i32
    %c0_i32_0 = arith.constant 0 : i32
    %c0_i32_1 = arith.constant 0 : i32
    return %c0_i32, %c0_i32_0 : i32, i32
  }
  func.func @transform_5(%arg0: i32) -> (i32, i32) {
    %c0_i32 = arith.constant 0 : i32
    %c0_i32_0 = arith.constant 0 : i32
    %c0_i32_1 = arith.constant 0 : i32
    return %c0_i32, %c0_i32_0 : i32, i32
  }
  func.func @transform_6(%arg0: i32) -> (i32, i32) {
    %c0_i32 = arith.constant 0 : i32
    %c0_i32_0 = arith.constant 0 : i32
    %c0_i32_1 = arith.constant 0 : i32
    return %c0_i32, %c0_i32_0 : i32, i32
  }
  func.func @transform_7(%arg0: i32) -> (i32, i32) {
    %c0_i32 = arith.constant 0 : i32
    %c0_i32_0 = arith.constant 0 : i32
    %c0_i32_1 = arith.constant 0 : i32
    return %c0_i32, %c0_i32_0 : i32, i32
  }
  func.func @transform_8(%arg0: i32) -> (i32, i32) {
    %c0_i32 = arith.constant 0 : i32
    %c0_i32_0 = arith.constant 0 : i32
    %c0_i32_1 = arith.constant 0 : i32
    return %c0_i32, %c0_i32_0 : i32, i32
  }
  func.func @transform_9(%arg0: i32) -> (i32, i32) {
    %c0_i32 = arith.constant 0 : i32
    %c0_i32_0 = arith.constant 0 : i32
    return %c0_i32, %arg0 : i32, i32
  }
}

</mosaic_0001>

<llo_original>
// kernel: tpu_custom_call.1
$region0: #{tpu_custom_call.1}
  #allocation0 [shape = 'u32[]', space=smem, size = 0x4, offset = 0x4, fixed_abs, tag = 'smem constant byte address 0x4 - core index']
  #allocation1 [shape = 'u32[144,128]{1,0:T(1,128)}', space=vmem, size = 0x12000, scoped, tag = 'internal scratch']
  #allocation2 [shape = 'f32[1,1]{1,0:T(1,128)S(1)}', space=vmem, size = 0x200, scoped, tag = 'scoped memory for tpu_custom_call.1']
  %s0 = inlined_call_operand.vmem [shape: f32[96,8], index: 0, kind: input, shape index: {}]
  %s1 = inlined_call_operand.vmem [shape: f32[96,8], index: 1, kind: input, shape index: {}]
  %s2 = inlined_call_operand.vmem [shape: f32[8,32], index: 2, kind: input, shape index: {}]
  %s3 = inlined_call_operand.vmem [shape: f32[8,32], index: 3, kind: input, shape index: {}]
  %s4 = inlined_call_operand.vmem [shape: f32[1,32], index: 4, kind: input, shape index: {}]
  %s5 = inlined_call_operand.vmem [shape: f32[32,32], index: 5, kind: input, shape index: {}]
  %s6 = inlined_call_operand.vmem [shape: f32[1,32], index: 6, kind: input, shape index: {}]
  %s7 = inlined_call_operand.vmem [shape: f32[1,32], index: 7, kind: input, shape index: {}]
  %s8 = inlined_call_operand.<no memory space> [shape: f32[1,1], index: 8, kind: input, shape index: {}]
  %s9 = inlined_call_operand.hbm [shape: f32[1,96], index: 9, kind: output, shape index: {}]
  %s10 = sld [smem:[#allocation0]]
  $region46: #{tpu_custom_call.1} parent=0
    _
  %s12 = ssub.s32 1, %s10
  %s13 = scalar_select 0, %s12, %s10
  %v14 = vstv %s8
  %15 = vst [vmem:[#allocation2] sm:$0x1] %v14
  $region1: #{tpu_custom_call.1} parent=0
    #allocation3 [shape = 'u8[512]{0}', space=vmem, size = 0x400, scoped, tag = 'output window, operand 0, single buffered']
    #allocation4 [shape = 's32[1]{0}', space=sflag, size = 0x4, scoped, tag = 'scoped memory for tpu_custom_call.1']
    %16 = vsyncpa [#allocation4], 0
    // Predicated region
    $region2: #{tpu_custom_call.1} parent=1 // pred_check
      _
    $region3: #{tpu_custom_call.1} parent=1 // pred_check_branch
      %18 = sbr.rel (0) target = $region5
    $region4: #{tpu_custom_call.1} parent=1 // pred_region
      _
    $region5: #{tpu_custom_call.1} parent=1 // pred_fallthru
      _
    // Predicated region
    $region6: #{tpu_custom_call.1} parent=1 // pred_check
      _
    $region7: #{tpu_custom_call.1} parent=1 // pred_check_branch
      %20 = sbr.rel (0) target = $region9
    $region8: #{tpu_custom_call.1} parent=1 // pred_region
      _
    $region9: #{tpu_custom_call.1} parent=1 // pred_fallthru
      _
    // Predicated region
    $region10: #{tpu_custom_call.1} parent=1 // pred_check
      _
    $region11: #{tpu_custom_call.1} parent=1 // pred_check_branch
      %22 = sbr.rel (0) target = $region13
    $region12: #{tpu_custom_call.1} parent=1 // pred_region
      _
    $region13: #{tpu_custom_call.1} parent=1 // pred_fallthru
      _
    // Predicated region
    $region14: #{tpu_custom_call.1} parent=1 // pred_check
      _
    $region15: #{tpu_custom_call.1} parent=1 // pred_check_branch
      %24 = sbr.rel (0) target = $region17
    $region16: #{tpu_custom_call.1} parent=1 // pred_region
      _
    $region17: #{tpu_custom_call.1} parent=1 // pred_fallthru
      _
    // Predicated region
    $region18: #{tpu_custom_call.1} parent=1 // pred_check
      _
    $region19: #{tpu_custom_call.1} parent=1 // pred_check_branch
      %26 = sbr.rel (0) target = $region21
    $region20: #{tpu_custom_call.1} parent=1 // pred_region
      _
    $region21: #{tpu_custom_call.1} parent=1 // pred_fallthru
      _
    // Predicated region
    $region22: #{tpu_custom_call.1} parent=1 // pred_check
      _
    $region23: #{tpu_custom_call.1} parent=1 // pred_check_branch
      %28 = sbr.rel (0) target = $region25
    $region24: #{tpu_custom_call.1} parent=1 // pred_region
      _
    $region25: #{tpu_custom_call.1} parent=1 // pred_fallthru
      _
    // Predicated region
    $region26: #{tpu_custom_call.1} parent=1 // pred_check
      _
    $region27: #{tpu_custom_call.1} parent=1 // pred_check_branch
      %30 = sbr.rel (0) target = $region29
    $region28: #{tpu_custom_call.1} parent=1 // pred_region
      _
    $region29: #{tpu_custom_call.1} parent=1 // pred_fallthru
      _
    // Predicated region
    $region30: #{tpu_custom_call.1} parent=1 // pred_check
      _
    $region31: #{tpu_custom_call.1} parent=1 // pred_check_branch
      %32 = sbr.rel (0) target = $region33
    $region32: #{tpu_custom_call.1} parent=1 // pred_region
      _
    $region33: #{tpu_custom_call.1} parent=1 // pred_fallthru
      _
    // Predicated region
    $region34: #{tpu_custom_call.1} parent=1 // pred_check
      _
    $region35: #{tpu_custom_call.1} parent=1 // pred_check_branch
      %34 = sbr.rel (0) target = $region37
    $region36: #{tpu_custom_call.1} parent=1 // pred_region
      _
    $region37: #{tpu_custom_call.1} parent=1 // pred_fallthru
      _
    %v35 = vld [vmem:[%s0] sm:$0xff]
    %v36 = vld [vmem:[%s0 + $0x8] sm:$0xff]
    %v37 = vld [vmem:[%s0 + $0x10] sm:$0xff]
    %v38 = vld [vmem:[%s0 + $0x18] sm:$0xff]
    %v39 = vld [vmem:[%s0 + $0x20] sm:$0xff]
    %v40 = vld [vmem:[%s0 + $0x28] sm:$0xff]
    %v41 = vld [vmem:[%s0 + $0x30] sm:$0xff]
    %v42 = vld [vmem:[%s0 + $0x38] sm:$0xff]
    %v43 = vld [vmem:[%s0 + $0x40] sm:$0xff]
    %v44 = vld [vmem:[%s0 + $0x48] sm:$0xff]
    %v45 = vld [vmem:[%s0 + $0x50] sm:$0xff]
    %v46 = vld [vmem:[%s0 + $0x58] sm:$0xff]
    %v47 = vld [vmem:[%s1] sm:$0xff]
    %v48 = vld [vmem:[%s1 + $0x8] sm:$0xff]
    %v49 = vld [vmem:[%s1 + $0x10] sm:$0xff]
    %v50 = vld [vmem:[%s1 + $0x18] sm:$0xff]
    %v51 = vld [vmem:[%s1 + $0x20] sm:$0xff]
    %v52 = vld [vmem:[%s1 + $0x28] sm:$0xff]
    %v53 = vld [vmem:[%s1 + $0x30] sm:$0xff]
    %v54 = vld [vmem:[%s1 + $0x38] sm:$0xff]
    %v55 = vld [vmem:[%s1 + $0x40] sm:$0xff]
    %v56 = vld [vmem:[%s1 + $0x48] sm:$0xff]
    %v57 = vld [vmem:[%s1 + $0x50] sm:$0xff]
    %v58 = vld [vmem:[%s1 + $0x58] sm:$0xff]
    %v59 = vld [vmem:[%s2] sm:$0xff]
    %v60 = vld [vmem:[%s3] sm:$0xff]
    %v61 = vld [vmem:[%s4] sm:$0x1]
    %vm62 = vcmask 64512
    %v64 = vsel %vm62, %v47, 0
    %v67 = vsel %vm62, %v48, 0
    %v70 = vsel %vm62, %v49, 0
    %v73 = vsel %vm62, %v50, 0
    %v76 = vsel %vm62, %v51, 0
    %v79 = vsel %vm62, %v52, 0
    %v82 = vsel %vm62, %v53, 0
    %v85 = vsel %vm62, %v54, 0
    %v88 = vsel %vm62, %v55, 0
    %v91 = vsel %vm62, %v56, 0
    %v94 = vsel %vm62, %v57, 0
    %v97 = vsel %vm62, %v58, 0
    %99 = vmatprep.subr.mxu0 0.0
    %100 = vmatpush1.msra.mxu0 0.0
    %101 = vmatprep.subr.mxu0 0.0
    %102 = vmatpush1.msra.mxu0 0.0
    %103 = vmatprep.subr.mxu0 0.0
    %104 = vmatpush1.msra.mxu0 0.0
    %105 = vmatprep.subr.mxu0 0.0
    %106 = vmatpush1.msra.mxu0 0.0
    %107 = vmatprep.subr.mxu0 0.0
    %108 = vmatpush1.msra.mxu0 0.0
    %109 = vmatprep.subr.mxu0 0.0
    %110 = vmatpush1.msra.mxu0 0.0
    %111 = vmatprep.subr.mxu0 0.0
    %112 = vmatpush1.msra.mxu0 0.0
    %113 = vmatprep.subr.mxu0 0.0
    %114 = vmatpush1.msra.mxu0 0.0
    %115 = vmatprep.subr.mxu0 0.0
    %116 = vmatpush1.msra.mxu0 0.0
    %117 = vmatprep.subr.mxu0 0.0
    %118 = vmatpush1.msra.mxu0 0.0
    %119 = vmatprep.subr.mxu0 0.0
    %120 = vmatpush1.msra.mxu0 0.0
    %121 = vmatprep.subr.mxu0 0.0
    %122 = vmatpush1.msra.mxu0 0.0
    %123 = vmatprep.subr.mxu0 0.0
    %124 = vmatpush1.msra.mxu0 0.0
    %125 = vmatprep.subr.mxu0 0.0
    %126 = vmatpush1.msra.mxu0 0.0
    %127 = vmatprep.subr.mxu0 0.0
    %128 = vmatpush1.msra.mxu0 0.0
    %129 = vmatprep.subr.mxu0 0.0
    %130 = vmatpush1.msra.mxu0 %v60
    %131 = vmatprep.subr.mxu0 0.0
    %132 = vmatpush2.msra.mxu0 0.0
    %133 = vmatprep.subr.mxu0 0.0
    %134 = vmatpush2.msra.mxu0 0.0
    %135 = vmatprep.subr.mxu0 0.0
    %136 = vmatpush2.msra.mxu0 0.0
    %137 = vmatprep.subr.mxu0 0.0
    %138 = vmatpush2.msra.mxu0 0.0
    %139 = vmatprep.subr.mxu0 0.0
    %140 = vmatpush2.msra.mxu0 0.0
    %141 = vmatprep.subr.mxu0 0.0
    %142 = vmatpush2.msra.mxu0 0.0
    %143 = vmatprep.subr.mxu0 0.0
    %144 = vmatpush2.msra.mxu0 0.0
    %145 = vmatprep.subr.mxu0 0.0
    %146 = vmatpush2.msra.mxu0 0.0
    %147 = vmatprep.subr.mxu0 0.0
    %148 = vmatpush2.msra.mxu0 0.0
    %149 = vmatprep.subr.mxu0 0.0
    %150 = vmatpush2.msra.mxu0 0.0
    %151 = vmatprep.subr.mxu0 0.0
    %152 = vmatpush2.msra.mxu0 0.0
    %153 = vmatprep.subr.mxu0 0.0
    %154 = vmatpush2.msra.mxu0 0.0
    %155 = vmatprep.subr.mxu0 0.0
    %156 = vmatpush2.msra.mxu0 0.0
    %157 = vmatprep.subr.mxu0 0.0
    %158 = vmatpush2.msra.mxu0 0.0
    %159 = vmatprep.subr.mxu0 0.0
    %160 = vmatpush2.msra.mxu0 0.0
    %161 = vmatprep.subr.mxu0 0.0
    %162 = vmatpush2.msra.mxu0 0.0
    %163 = vmatprep.mubr.f32.mxu0 0.0
    %164 = vmatmul.mubr.f32.gmra.mxu0 %v64
    %v165 = vpop.f32.mrf.mxu0
    %v166 = vadd.f32 0.0, %v165
    %v167 = vpop.f32.mrf.mxu0
    %168 = vmatprep.mubr.f32.mxu0 0.0
    %169 = vmatmul.mubr.f32.gmra.mxu0 %v67
    %v170 = vpop.f32.mrf.mxu0
    %v171 = vadd.f32 0.0, %v170
    %v172 = vpop.f32.mrf.mxu0
    %173 = vmatprep.mubr.f32.mxu0 0.0
    %174 = vmatmul.mubr.f32.gmra.mxu0 %v70
    %v175 = vpop.f32.mrf.mxu0
    %v176 = vadd.f32 0.0, %v175
    %v177 = vpop.f32.mrf.mxu0
    %178 = vmatprep.mubr.f32.mxu0 0.0
    %179 = vmatmul.mubr.f32.gmra.mxu0 %v73
    %v180 = vpop.f32.mrf.mxu0
    %v181 = vadd.f32 0.0, %v180
    %v182 = vpop.f32.mrf.mxu0
    %183 = vmatprep.mubr.f32.mxu0 0.0
    %184 = vmatmul.mubr.f32.gmra.mxu0 %v76
    %v185 = vpop.f32.mrf.mxu0
    %v186 = vadd.f32 0.0, %v185
    %v187 = vpop.f32.mrf.mxu0
    %188 = vmatprep.mubr.f32.mxu0 0.0
    %189 = vmatmul.mubr.f32.gmra.mxu0 %v79
    %v190 = vpop.f32.mrf.mxu0
    %v191 = vadd.f32 0.0, %v190
    %v192 = vpop.f32.mrf.mxu0
    %193 = vmatprep.mubr.f32.mxu0 0.0
    %194 = vmatmul.mubr.f32.gmra.mxu0 %v82
    %v195 = vpop.f32.mrf.mxu0
    %v196 = vadd.f32 0.0, %v195
    %v197 = vpop.f32.mrf.mxu0
    %198 = vmatprep.mubr.f32.mxu0 0.0
    %199 = vmatmul.mubr.f32.gmra.mxu0 %v85
    %v200 = vpop.f32.mrf.mxu0
    %v201 = vadd.f32 0.0, %v200
    %v202 = vpop.f32.mrf.mxu0
    %203 = vmatprep.mubr.f32.mxu0 0.0
    %204 = vmatmul.mubr.f32.gmra.mxu0 %v88
    %v205 = vpop.f32.mrf.mxu0
    %v206 = vadd.f32 0.0, %v205
    %v207 = vpop.f32.mrf.mxu0
    %208 = vmatprep.mubr.f32.mxu0 0.0
    %209 = vmatmul.mubr.f32.gmra.mxu0 %v91
    %v210 = vpop.f32.mrf.mxu0
    %v211 = vadd.f32 0.0, %v210
    %v212 = vpop.f32.mrf.mxu0
    %213 = vmatprep.mubr.f32.mxu0 0.0
    %214 = vmatmul.mubr.f32.gmra.mxu0 %v94
    %v215 = vpop.f32.mrf.mxu0
    %v216 = vadd.f32 0.0, %v215
    %v217 = vpop.f32.mrf.mxu0
    %218 = vmatprep.mubr.f32.mxu0 0.0
    %219 = vmatmul.mubr.f32.gmra.mxu0 %v97
    %v220 = vpop.f32.mrf.mxu0
    %v221 = vadd.f32 0.0, %v220
    %v222 = vpop.f32.mrf.mxu0
    %223 = vdwg.mxu0
    %v225 = vsel %vm62, %v35, 0
    %v228 = vsel %vm62, %v36, 0
    %v231 = vsel %vm62, %v37, 0
    %v234 = vsel %vm62, %v38, 0
    %v237 = vsel %vm62, %v39, 0
    %v240 = vsel %vm62, %v40, 0
    %v243 = vsel %vm62, %v41, 0
    %v246 = vsel %vm62, %v42, 0
    %v249 = vsel %vm62, %v43, 0
    %v252 = vsel %vm62, %v44, 0
    %v255 = vsel %vm62, %v45, 0
    %v258 = vsel %vm62, %v46, 0
    %260 = vmatprep.subr.mxu0 0.0
    %261 = vmatpush1.msra.mxu0 0.0
    %262 = vmatprep.subr.mxu0 0.0
    %263 = vmatpush1.msra.mxu0 0.0
    %264 = vmatprep.subr.mxu0 0.0
    %265 = vmatpush1.msra.mxu0 0.0
    %266 = vmatprep.subr.mxu0 0.0
    %267 = vmatpush1.msra.mxu0 0.0
    %268 = vmatprep.subr.mxu0 0.0
    %269 = vmatpush1.msra.mxu0 0.0
    %270 = vmatprep.subr.mxu0 0.0
    %271 = vmatpush1.msra.mxu0 0.0
    %272 = vmatprep.subr.mxu0 0.0
    %273 = vmatpush1.msra.mxu0 0.0
    %274 = vmatprep.subr.mxu0 0.0
    %275 = vmatpush1.msra.mxu0 0.0
    %276 = vmatprep.subr.mxu0 0.0
    %277 = vmatpush1.msra.mxu0 0.0
    %278 = vmatprep.subr.mxu0 0.0
    %279 = vmatpush1.msra.mxu0 0.0
    %280 = vmatprep.subr.mxu0 0.0
    %281 = vmatpush1.msra.mxu0 0.0
    %282 = vmatprep.subr.mxu0 0.0
    %283 = vmatpush1.msra.mxu0 0.0
    %284 = vmatprep.subr.mxu0 0.0
    %285 = vmatpush1.msra.mxu0 0.0
    %286 = vmatprep.subr.mxu0 0.0
    %287 = vmatpush1.msra.mxu0 0.0
    %288 = vmatprep.subr.mxu0 0.0
    %289 = vmatpush1.msra.mxu0 0.0
    %290 = vmatprep.subr.mxu0 0.0
    %291 = vmatpush1.msra.mxu0 %v59
    %292 = vmatprep.subr.mxu0 0.0
    %293 = vmatpush2.msra.mxu0 0.0
    %294 = vmatprep.subr.mxu0 0.0
    %295 = vmatpush2.msra.mxu0 0.0
    %296 = vmatprep.subr.mxu0 0.0
    %297 = vmatpush2.msra.mxu0 0.0
    %298 = vmatprep.subr.mxu0 0.0
    %299 = vmatpush2.msra.mxu0 0.0
    %300 = vmatprep.subr.mxu0 0.0
    %301 = vmatpush2.msra.mxu0 0.0
    %302 = vmatprep.subr.mxu0 0.0
    %303 = vmatpush2.msra.mxu0 0.0
    %304 = vmatprep.subr.mxu0 0.0
    %305 = vmatpush2.msra.mxu0 0.0
    %306 = vmatprep.subr.mxu0 0.0
    %307 = vmatpush2.msra.mxu0 0.0
    %308 = vmatprep.subr.mxu0 0.0
    %309 = vmatpush2.msra.mxu0 0.0
    %310 = vmatprep.subr.mxu0 0.0
    %311 = vmatpush2.msra.mxu0 0.0
    %312 = vmatprep.subr.mxu0 0.0
    %313 = vmatpush2.msra.mxu0 0.0
    %314 = vmatprep.subr.mxu0 0.0
    %315 = vmatpush2.msra.mxu0 0.0
    %316 = vmatprep.subr.mxu0 0.0
    %317 = vmatpush2.msra.mxu0 0.0
    %318 = vmatprep.subr.mxu0 0.0
    %319 = vmatpush2.msra.mxu0 0.0
    %320 = vmatprep.subr.mxu0 0.0
    %321 = vmatpush2.msra.mxu0 0.0
    %322 = vmatprep.subr.mxu0 0.0
    %323 = vmatpush2.msra.mxu0 0.0
    %324 = vmatprep.mubr.f32.mxu0 0.0
    %325 = vmatmul.mubr.f32.gmra.mxu0 %v225
    %v326 = vpop.f32.mrf.mxu0
    %v327 = vadd.f32 %v166, %v326
    %v328 = vpop.f32.mrf.mxu0
    %329 = vmatprep.mubr.f32.mxu0 0.0
    %330 = vmatmul.mubr.f32.gmra.mxu0 %v228
    %v331 = vpop.f32.mrf.mxu0
    %v332 = vadd.f32 %v171, %v331
    %v333 = vpop.f32.mrf.mxu0
    %334 = vmatprep.mubr.f32.mxu0 0.0
    %335 = vmatmul.mubr.f32.gmra.mxu0 %v231
    %v336 = vpop.f32.mrf.mxu0
    %v337 = vadd.f32 %v176, %v336
    %v338 = vpop.f32.mrf.mxu0
    %339 = vmatprep.mubr.f32.mxu0 0.0
    %340 = vmatmul.mubr.f32.gmra.mxu0 %v234
    %v341 = vpop.f32.mrf.mxu0
    %v342 = vadd.f32 %v181, %v341
    %v343 = vpop.f32.mrf.mxu0
    %344 = vmatprep.mubr.f32.mxu0 0.0
    %345 = vmatmul.mubr.f32.gmra.mxu0 %v237
    %v346 = vpop.f32.mrf.mxu0
    %v347 = vadd.f32 %v186, %v346
    %v348 = vpop.f32.mrf.mxu0
    %349 = vmatprep.mubr.f32.mxu0 0.0
    %350 = vmatmul.mubr.f32.gmra.mxu0 %v240
    %v351 = vpop.f32.mrf.mxu0
    %v352 = vadd.f32 %v191, %v351
    %v353 = vpop.f32.mrf.mxu0
    %354 = vmatprep.mubr.f32.mxu0 0.0
    %355 = vmatmul.mubr.f32.gmra.mxu0 %v243
    %v356 = vpop.f32.mrf.mxu0
    %v357 = vadd.f32 %v196, %v356
    %v358 = vpop.f32.mrf.mxu0
    %359 = vmatprep.mubr.f32.mxu0 0.0
    %360 = vmatmul.mubr.f32.gmra.mxu0 %v246
    %v361 = vpop.f32.mrf.mxu0
    %v362 = vadd.f32 %v201, %v361
    %v363 = vpop.f32.mrf.mxu0
    %364 = vmatprep.mubr.f32.mxu0 0.0
    %365 = vmatmul.mubr.f32.gmra.mxu0 %v249
    %v366 = vpop.f32.mrf.mxu0
    %v367 = vadd.f32 %v206, %v366
    %v368 = vpop.f32.mrf.mxu0
    %369 = vmatprep.mubr.f32.mxu0 0.0
    %370 = vmatmul.mubr.f32.gmra.mxu0 %v252
    %v371 = vpop.f32.mrf.mxu0
    %v372 = vadd.f32 %v211, %v371
    %v373 = vpop.f32.mrf.mxu0
    %374 = vmatprep.mubr.f32.mxu0 0.0
    %375 = vmatmul.mubr.f32.gmra.mxu0 %v255
    %v376 = vpop.f32.mrf.mxu0
    %v377 = vadd.f32 %v216, %v376
    %v378 = vpop.f32.mrf.mxu0
    %379 = vmatprep.mubr.f32.mxu0 0.0
    %380 = vmatmul.mubr.f32.gmra.mxu0 %v258
    %v381 = vpop.f32.mrf.mxu0
    %v382 = vadd.f32 %v221, %v381
    %v383 = vpop.f32.mrf.mxu0
    %384 = vdwg.mxu0
    %v386 = vlaneseq
    %v387 = vshrl.u32 %v386, 7
    %v388 = vsub.s32 0, %v387
    %v389 = vrot.slane %v61, %v388
    %v391 = vadd.f32 %v327, %v389
    %v392 = vadd.f32 %v332, %v389
    %v393 = vadd.f32 %v337, %v389
    %v394 = vadd.f32 %v342, %v389
    %v395 = vadd.f32 %v347, %v389
    %v396 = vadd.f32 %v352, %v389
    %v397 = vadd.f32 %v357, %v389
    %v398 = vadd.f32 %v362, %v389
    %v399 = vadd.f32 %v367, %v389
    %v400 = vadd.f32 %v372, %v389
    %v401 = vadd.f32 %v377, %v389
    %v402 = vadd.f32 %v382, %v389
    %v403 = vmax.f32 %v391, 0.0
    %v404 = vmax.f32 %v392, 0.0
    %v405 = vmax.f32 %v393, 0.0
    %v406 = vmax.f32 %v394, 0.0
    %v407 = vmax.f32 %v395, 0.0
    %v408 = vmax.f32 %v396, 0.0
    %v409 = vmax.f32 %v397, 0.0
    %v410 = vmax.f32 %v398, 0.0
    %v411 = vmax.f32 %v399, 0.0
    %v412 = vmax.f32 %v400, 0.0
    %v413 = vmax.f32 %v401, 0.0
    %v414 = vmax.f32 %v402, 0.0
    %v415 = vld [vmem:[%s5] sm:$0xff]
    %v416 = vld [vmem:[%s5 + $0x8] sm:$0xff]
    %v417 = vld [vmem:[%s5 + $0x10] sm:$0xff]
    %v418 = vld [vmem:[%s5 + $0x18] sm:$0xff]
    %v419 = vld [vmem:[%s6] sm:$0x1]
    %v421 = vlaneseq
    %v422 = vshrl.u32 %v421, 7
    %v423 = vsub.s32 0, %v422
    %v424 = vrot.slane %v419, %v423
    %vm426 = vcmask 261120
    %v428 = vsel %vm426, %v403, 0
    %v431 = vsel %vm426, %v404, 0
    %v434 = vsel %vm426, %v405, 0
    %v437 = vsel %vm426, %v406, 0
    %v440 = vsel %vm426, %v407, 0
    %v443 = vsel %vm426, %v408, 0
    %v446 = vsel %vm426, %v409, 0
    %v449 = vsel %vm426, %v410, 0
    %v452 = vsel %vm426, %v411, 0
    %v455 = vsel %vm426, %v412, 0
    %v458 = vsel %vm426, %v413, 0
    %v461 = vsel %vm426, %v414, 0
    %463 = vmatprep.subr.mxu0 0.0
    %464 = vmatpush1.msra.mxu0 0.0
    %465 = vmatprep.subr.mxu0 0.0
    %466 = vmatpush1.msra.mxu0 0.0
    %467 = vmatprep.subr.mxu0 0.0
    %468 = vmatpush1.msra.mxu0 0.0
    %469 = vmatprep.subr.mxu0 0.0
    %470 = vmatpush1.msra.mxu0 0.0
    %471 = vmatprep.subr.mxu0 0.0
    %472 = vmatpush1.msra.mxu0 0.0
    %473 = vmatprep.subr.mxu0 0.0
    %474 = vmatpush1.msra.mxu0 0.0
    %475 = vmatprep.subr.mxu0 0.0
    %476 = vmatpush1.msra.mxu0 0.0
    %477 = vmatprep.subr.mxu0 0.0
    %478 = vmatpush1.msra.mxu0 0.0
    %479 = vmatprep.subr.mxu0 0.0
    %480 = vmatpush1.msra.mxu0 0.0
    %481 = vmatprep.subr.mxu0 0.0
    %482 = vmatpush1.msra.mxu0 0.0
    %483 = vmatprep.subr.mxu0 0.0
    %484 = vmatpush1.msra.mxu0 0.0
    %485 = vmatprep.subr.mxu0 0.0
    %486 = vmatpush1.msra.mxu0 0.0
    %487 = vmatprep.subr.mxu0 0.0
    %488 = vmatpush1.msra.mxu0 %v418
    %489 = vmatprep.subr.mxu0 0.0
    %490 = vmatpush1.msra.mxu0 %v417
    %491 = vmatprep.subr.mxu0 0.0
    %492 = vmatpush1.msra.mxu0 %v416
    %493 = vmatprep.subr.mxu0 0.0
    %494 = vmatpush1.msra.mxu0 %v415
    %495 = vmatprep.subr.mxu0 0.0
    %496 = vmatpush2.msra.mxu0 0.0
    %497 = vmatprep.subr.mxu0 0.0
    %498 = vmatpush2.msra.mxu0 0.0
    %499 = vmatprep.subr.mxu0 0.0
    %500 = vmatpush2.msra.mxu0 0.0
    %501 = vmatprep.subr.mxu0 0.0
    %502 = vmatpush2.msra.mxu0 0.0
    %503 = vmatprep.subr.mxu0 0.0
    %504 = vmatpush2.msra.mxu0 0.0
    %505 = vmatprep.subr.mxu0 0.0
    %506 = vmatpush2.msra.mxu0 0.0
    %507 = vmatprep.subr.mxu0 0.0
    %508 = vmatpush2.msra.mxu0 0.0
    %509 = vmatprep.subr.mxu0 0.0
    %510 = vmatpush2.msra.mxu0 0.0
    %511 = vmatprep.subr.mxu0 0.0
    %512 = vmatpush2.msra.mxu0 0.0
    %513 = vmatprep.subr.mxu0 0.0
    %514 = vmatpush2.msra.mxu0 0.0
    %515 = vmatprep.subr.mxu0 0.0
    %516 = vmatpush2.msra.mxu0 0.0
    %517 = vmatprep.subr.mxu0 0.0
    %518 = vmatpush2.msra.mxu0 0.0
    %519 = vmatprep.subr.mxu0 0.0
    %520 = vmatpush2.msra.mxu0 0.0
    %521 = vmatprep.subr.mxu0 0.0
    %522 = vmatpush2.msra.mxu0 0.0
    %523 = vmatprep.subr.mxu0 0.0
    %524 = vmatpush2.msra.mxu0 0.0
    %525 = vmatprep.subr.mxu0 0.0
    %526 = vmatpush2.msra.mxu0 0.0
    %527 = vmatprep.mubr.f32.mxu0 0.0
    %528 = vmatmul.mubr.f32.gmra.mxu0 %v428
    %v529 = vpop.f32.mrf.mxu0
    %v530 = vadd.f32 %v424, %v529
    %v531 = vpop.f32.mrf.mxu0
    %532 = vmatprep.mubr.f32.mxu0 0.0
    %533 = vmatmul.mubr.f32.gmra.mxu0 %v431
    %v534 = vpop.f32.mrf.mxu0
    %v535 = vadd.f32 %v424, %v534
    %v536 = vpop.f32.mrf.mxu0
    %537 = vmatprep.mubr.f32.mxu0 0.0
    %538 = vmatmul.mubr.f32.gmra.mxu0 %v434
    %v539 = vpop.f32.mrf.mxu0
    %v540 = vadd.f32 %v424, %v539
    %v541 = vpop.f32.mrf.mxu0
    %542 = vmatprep.mubr.f32.mxu0 0.0
    %543 = vmatmul.mubr.f32.gmra.mxu0 %v437
    %v544 = vpop.f32.mrf.mxu0
    %v545 = vadd.f32 %v424, %v544
    %v546 = vpop.f32.mrf.mxu0
    %547 = vmatprep.mubr.f32.mxu0 0.0
    %548 = vmatmul.mubr.f32.gmra.mxu0 %v440
    %v549 = vpop.f32.mrf.mxu0
    %v550 = vadd.f32 %v424, %v549
    %v551 = vpop.f32.mrf.mxu0
    %552 = vmatprep.mubr.f32.mxu0 0.0
    %553 = vmatmul.mubr.f32.gmra.mxu0 %v443
    %v554 = vpop.f32.mrf.mxu0
    %v555 = vadd.f32 %v424, %v554
    %v556 = vpop.f32.mrf.mxu0
    %557 = vmatprep.mubr.f32.mxu0 0.0
    %558 = vmatmul.mubr.f32.gmra.mxu0 %v446
    %v559 = vpop.f32.mrf.mxu0
    %v560 = vadd.f32 %v424, %v559
    %v561 = vpop.f32.mrf.mxu0
    %562 = vmatprep.mubr.f32.mxu0 0.0
    %563 = vmatmul.mubr.f32.gmra.mxu0 %v449
    %v564 = vpop.f32.mrf.mxu0
    %v565 = vadd.f32 %v424, %v564
    %v566 = vpop.f32.mrf.mxu0
    %567 = vmatprep.mubr.f32.mxu0 0.0
    %568 = vmatmul.mubr.f32.gmra.mxu0 %v452
    %v569 = vpop.f32.mrf.mxu0
    %v570 = vadd.f32 %v424, %v569
    %v571 = vpop.f32.mrf.mxu0
    %572 = vmatprep.mubr.f32.mxu0 0.0
    %573 = vmatmul.mubr.f32.gmra.mxu0 %v455
    %v574 = vpop.f32.mrf.mxu0
    %v575 = vadd.f32 %v424, %v574
    %v576 = vpop.f32.mrf.mxu0
    %577 = vmatprep.mubr.f32.mxu0 0.0
    %578 = vmatmul.mubr.f32.gmra.mxu0 %v458
    %v579 = vpop.f32.mrf.mxu0
    %v580 = vadd.f32 %v424, %v579
    %v581 = vpop.f32.mrf.mxu0
    %582 = vmatprep.mubr.f32.mxu0 0.0
    %583 = vmatmul.mubr.f32.gmra.mxu0 %v461
    %v584 = vpop.f32.mrf.mxu0
    %v585 = vadd.f32 %v424, %v584
    %v586 = vpop.f32.mrf.mxu0
    %587 = vdwg.mxu0
    %v588 = vmax.f32 %v530, 0.0
    %v589 = vmax.f32 %v535, 0.0
    %v590 = vmax.f32 %v540, 0.0
    %v591 = vmax.f32 %v545, 0.0
    %v592 = vmax.f32 %v550, 0.0
    %v593 = vmax.f32 %v555, 0.0
    %v594 = vmax.f32 %v560, 0.0
    %v595 = vmax.f32 %v565, 0.0
    %v596 = vmax.f32 %v570, 0.0
    %v597 = vmax.f32 %v575, 0.0
    %v598 = vmax.f32 %v580, 0.0
    %v599 = vmax.f32 %v585, 0.0
    %v600 = vld [vmem:[%s7] sm:$0x1]
    %v601 = vld [vmem:[#allocation2] sm:$0x1]
    %v603 = vlaneseq
    %v604 = vshrl.u32 %v603, 7
    %v605 = vsub.s32 0, %v604
    %v606 = vrot.slane %v600, %v605
    %v608 = vmul.f32 %v588, %v606
    %v609 = vmul.f32 %v589, %v606
    %v610 = vmul.f32 %v590, %v606
    %v611 = vmul.f32 %v591, %v606
    %v612 = vmul.f32 %v592, %v606
    %v613 = vmul.f32 %v593, %v606
    %v614 = vmul.f32 %v594, %v606
    %v615 = vmul.f32 %v595, %v606
    %v616 = vmul.f32 %v596, %v606
    %v617 = vmul.f32 %v597, %v606
    %v618 = vmul.f32 %v598, %v606
    %v619 = vmul.f32 %v599, %v606
    %v620 = vsel %vm426, %v608, 0.0
    %621 = vadd.xlane.f32.xlu0 %v620
    %v622 = vpop.xlane.xlu0 %621
    %v623 = vsel %vm426, %v609, 0.0
    %624 = vadd.xlane.f32.xlu0 %v623
    %v625 = vpop.xlane.xlu0 %624
    %v626 = vsel %vm426, %v610, 0.0
    %627 = vadd.xlane.f32.xlu0 %v626
    %v628 = vpop.xlane.xlu0 %627
    %v629 = vsel %vm426, %v611, 0.0
    %630 = vadd.xlane.f32.xlu0 %v629
    %v631 = vpop.xlane.xlu0 %630
    %v632 = vsel %vm426, %v612, 0.0
    %633 = vadd.xlane.f32.xlu0 %v632
    %v634 = vpop.xlane.xlu0 %633
    %v635 = vsel %vm426, %v613, 0.0
    %636 = vadd.xlane.f32.xlu0 %v635
    %v637 = vpop.xlane.xlu0 %636
    %v638 = vsel %vm426, %v614, 0.0
    %639 = vadd.xlane.f32.xlu0 %v638
    %v640 = vpop.xlane.xlu0 %639
    %v641 = vsel %vm426, %v615, 0.0
    %642 = vadd.xlane.f32.xlu0 %v641
    %v643 = vpop.xlane.xlu0 %642
    %v644 = vsel %vm426, %v616, 0.0
    %645 = vadd.xlane.f32.xlu0 %v644
    %v646 = vpop.xlane.xlu0 %645
    %v647 = vsel %vm426, %v617, 0.0
    %648 = vadd.xlane.f32.xlu0 %v647
    %v649 = vpop.xlane.xlu0 %648
    %v650 = vsel %vm426, %v618, 0.0
    %651 = vadd.xlane.f32.xlu0 %v650
    %v652 = vpop.xlane.xlu0 %651
    %v653 = vsel %vm426, %v619, 0.0
    %654 = vadd.xlane.f32.xlu0 %v653
    %v655 = vpop.xlane.xlu0 %654
    %v657 = vlaneseq
    %v658 = vshrl.u32 %v657, 7
    %v659 = vsub.s32 0, %v658
    %v660 = vrot.slane %v601, %v659
    %v662 = vadd.f32 %v622, %v660
    %v663 = vadd.f32 %v625, %v660
    %v664 = vadd.f32 %v628, %v660
    %v665 = vadd.f32 %v631, %v660
    %v666 = vadd.f32 %v634, %v660
    %v667 = vadd.f32 %v637, %v660
    %v668 = vadd.f32 %v640, %v660
    %v669 = vadd.f32 %v643, %v660
    %v670 = vadd.f32 %v646, %v660
    %v671 = vadd.f32 %v649, %v660
    %v672 = vadd.f32 %v652, %v660
    %v673 = vadd.f32 %v655, %v660
    %686 = vset.pattern.permute.xlu0 0
    %687 = vperm.xlu0 %686, %v662
    %v688 = vpop.permute.xlu0 %687
    %689 = vset.pattern.permute.xlu0 0
    %690 = vperm.xlu0 %689, %v663
    %v691 = vpop.permute.xlu0 %690
    %692 = vset.pattern.permute.xlu0 0
    %693 = vperm.xlu0 %692, %v664
    %v694 = vpop.permute.xlu0 %693
    %695 = vset.pattern.permute.xlu0 0
    %696 = vperm.xlu0 %695, %v665
    %v697 = vpop.permute.xlu0 %696
    %698 = vset.pattern.permute.xlu0 0
    %699 = vperm.xlu0 %698, %v666
    %v700 = vpop.permute.xlu0 %699
    %701 = vset.pattern.permute.xlu0 0
    %702 = vperm.xlu0 %701, %v667
    %v703 = vpop.permute.xlu0 %702
    %704 = vset.pattern.permute.xlu0 0
    %705 = vperm.xlu0 %704, %v668
    %v706 = vpop.permute.xlu0 %705
    %707 = vset.pattern.permute.xlu0 0
    %708 = vperm.xlu0 %707, %v669
    %v709 = vpop.permute.xlu0 %708
    %710 = vset.pattern.permute.xlu0 0
    %711 = vperm.xlu0 %710, %v670
    %v712 = vpop.permute.xlu0 %711
    %713 = vset.pattern.permute.xlu0 0
    %714 = vperm.xlu0 %713, %v671
    %v715 = vpop.permute.xlu0 %714
    %716 = vset.pattern.permute.xlu0 0
    %717 = vperm.xlu0 %716, %v672
    %v718 = vpop.permute.xlu0 %717
    %719 = vset.pattern.permute.xlu0 0
    %720 = vperm.xlu0 %719, %v673
    %v721 = vpop.permute.xlu0 %720
    %v722 = vlaneseq
    %v723 = vand.u32 %v722, 127
    %v724 = vlaneseq
    %v725 = vshrl.u32 %v724, 7
    %v726 = vsub.s32 %v723, %v725
    %v727 = vrot.slane %v688, %v726
    %v728 = vadd.s32 %v723, 4294967288
    %v729 = vlaneseq
    %v730 = vshrl.u32 %v729, 7
    %v731 = vsub.s32 %v728, %v730
    %v732 = vrot.slane %v691, %v731
    %vm733 = vcmask 130112
    %v734 = vsel %vm733, %v732, %v727
    %v735 = vadd.s32 %v723, 4294967280
    %v736 = vlaneseq
    %v737 = vshrl.u32 %v736, 7
    %v738 = vsub.s32 %v735, %v737
    %v739 = vrot.slane %v694, %v738
    %vm740 = vcmask 195712
    %v741 = vsel %vm740, %v739, %v734
    %v742 = vadd.s32 %v723, 4294967272
    %v743 = vlaneseq
    %v744 = vshrl.u32 %v743, 7
    %v745 = vsub.s32 %v742, %v744
    %v746 = vrot.slane %v697, %v745
    %vm747 = vcmask 261312
    %v748 = vsel %vm747, %v746, %v741
    %v749 = vadd.s32 %v723, 4294967264
    %v750 = vlaneseq
    %v751 = vshrl.u32 %v750, 7
    %v752 = vsub.s32 %v749, %v751
    %v753 = vrot.slane %v700, %v752
    %vm754 = vcmask 326912
    %v755 = vsel %vm754, %v753, %v748
    %v756 = vadd.s32 %v723, 4294967256
    %v757 = vlaneseq
    %v758 = vshrl.u32 %v757, 7
    %v759 = vsub.s32 %v756, %v758
    %v760 = vrot.slane %v703, %v759
    %vm761 = vcmask 392512
    %v762 = vsel %vm761, %v760, %v755
    %v763 = vadd.s32 %v723, 4294967248
    %v764 = vlaneseq
    %v765 = vshrl.u32 %v764, 7
    %v766 = vsub.s32 %v763, %v765
    %v767 = vrot.slane %v706, %v766
    %vm768 = vcmask 458112
    %v769 = vsel %vm768, %v767, %v762
    %v770 = vadd.s32 %v723, 4294967240
    %v771 = vlaneseq
    %v772 = vshrl.u32 %v771, 7
    %v773 = vsub.s32 %v770, %v772
    %v774 = vrot.slane %v709, %v773
    %vm775 = vcmask 523712
    %v776 = vsel %vm775, %v774, %v769
    %v777 = vadd.s32 %v723, 4294967232
    %v778 = vlaneseq
    %v779 = vshrl.u32 %v778, 7
    %v780 = vsub.s32 %v777, %v779
    %v781 = vrot.slane %v712, %v780
    %vm782 = vcmask 589312
    %v783 = vsel %vm782, %v781, %v776
    %v784 = vadd.s32 %v723, 4294967224
    %v785 = vlaneseq
    %v786 = vshrl.u32 %v785, 7
    %v787 = vsub.s32 %v784, %v786
    %v788 = vrot.slane %v715, %v787
    %vm789 = vcmask 654912
    %v790 = vsel %vm789, %v788, %v783
    %v791 = vadd.s32 %v723, 4294967216
    %v792 = vlaneseq
    %v793 = vshrl.u32 %v792, 7
    %v794 = vsub.s32 %v791, %v793
    %v795 = vrot.slane %v718, %v794
    %vm796 = vcmask 720512
    %v797 = vsel %vm796, %v795, %v790
    %v798 = vadd.s32 %v723, 4294967208
    %v799 = vlaneseq
    %v800 = vshrl.u32 %v799, 7
    %v801 = vsub.s32 %v798, %v800
    %v802 = vrot.slane %v721, %v801
    %vm803 = vcmask 786112
    %v804 = vsel %vm803, %v802, %v797
    %vm806 = vcmask 778240
    %807 = vst.msk [vmem:[#allocation3] sm:$0x1] %vm806, %v804
    // Predicated region
    $region38: #{tpu_custom_call.1} parent=1 // pred_check
      _
    $region39: #{tpu_custom_call.1} parent=1 // pred_check_branch
      %809 = sbr.rel (0) target = $region41
    $region40: #{tpu_custom_call.1} parent=1 // pred_region
      %s811 = ssub.s32 16, 16
      %812 = vsyncadd [#allocation4], %s811
      %s814 = sshll.u32 [#allocation3], 4
      %s815 = int_to_ptr.vmem [resolvable:$true] %s814
      %817 = dma.vmem_to_hbm [thread:$0]  %s815, 16, %s9, [#allocation4]
    $region41: #{tpu_custom_call.1} parent=1 // pred_fallthru
      _
    // Predicated region
    $region42: #{tpu_custom_call.1} parent=1 // pred_check
      _
    $region43: #{tpu_custom_call.1} parent=1 // pred_check_branch
      %819 = sbr.rel (0) target = $region45
    $region44: #{tpu_custom_call.1} parent=1 // pred_region
      %820 = dma.done [#allocation4], 16
    $region45: #{tpu_custom_call.1} parent=1 // pred_fallthru
      _
    %821 = vsyncpa [#allocation4], 1

// kernel: tpu_custom_call.1
$region0: #{tpu_custom_call.1}
  #allocation0 [shape = 'u32[]', space=smem, size = 0x4, offset = 0x4, fixed_abs, tag = 'smem constant byte address 0x4 - core index']
  #allocation1 [shape = 'u32[144,128]{1,0:T(1,128)}', space=vmem, size = 0x12000, scoped, tag = 'internal scratch']
  #allocation2 [shape = 'f32[1,1]{1,0:T(1,128)S(1)}', space=vmem, size = 0x200, scoped, tag = 'scoped memory for tpu_custom_call.1']
  %s0 = inlined_call_operand.vmem [shape: f32[96,8], index: 0, kind: input, shape index: {}]
  %s1 = inlined_call_operand.vmem [shape: f32[96,8], index: 1, kind: input, shape index: {}]
  %s2 = inlined_call_operand.vmem [shape: f32[8,32], index: 2, kind: input, shape index: {}]
  %s3 = inlined_call_operand.vmem [shape: f32[8,32], index: 3, kind: input, shape index: {}]
  %s4 = inlined_call_operand.vmem [shape: f32[1,32], index: 4, kind: input, shape index: {}]
  %s5 = inlined_call_operand.vmem [shape: f32[32,32], index: 5, kind: input, shape index: {}]
  %s6 = inlined_call_operand.vmem [shape: f32[1,32], index: 6, kind: input, shape index: {}]
  %s7 = inlined_call_operand.vmem [shape: f32[1,32], index: 7, kind: input, shape index: {}]
  %s8 = inlined_call_operand.<no memory space> [shape: f32[1,1], index: 8, kind: input, shape index: {}]
  %s9 = inlined_call_operand.hbm [shape: f32[1,96], index: 9, kind: output, shape index: {}]
  %s10 = sld [smem:[#allocation0]]
  $region46: #{tpu_custom_call.1} parent=0
    _
  %s12 = ssub.s32 1, %s10
  %s13 = scalar_select 0, %s12, %s10
  %v14 = vstv %s8
  %15 = vst [vmem:[#allocation2] sm:$0x1] %v14
  $region1: #{tpu_custom_call.1} parent=0
    #allocation3 [shape = 'u8[512]{0}', space=vmem, size = 0x400, scoped, tag = 'output window, operand 0, single buffered']
    #allocation4 [shape = 's32[1]{0}', space=sflag, size = 0x4, scoped, tag = 'scoped memory for tpu_custom_call.1']
    %16 = vsyncpa [#allocation4], 0
    // Predicated region
    $region2: #{tpu_custom_call.1} parent=1 // pred_check
      _
    $region3: #{tpu_custom_call.1} parent=1 // pred_check_branch
      %18 = sbr.rel (0) target = $region5
    $region4: #{tpu_custom_call.1} parent=1 // pred_region
      _
    $region5: #{tpu_custom_call.1} parent=1 // pred_fallthru
      _
    // Predicated region
    $region6: #{tpu_custom_call.1} parent=1 // pred_check
      _
    $region7: #{tpu_custom_call.1} parent=1 // pred_check_branch
      %20 = sbr.rel (0) target = $region9
    $region8: #{tpu_custom_call.1} parent=1 // pred_region
      _
    $region9: #{tpu_custom_call.1} parent=1 // pred_fallthru
      _
    // Predicated region
    $region10: #{tpu_custom_call.1} parent=1 // pred_check
      _
    $region11: #{tpu_custom_call.1} parent=1 // pred_check_branch
      %22 = sbr.rel (0) target = $region13
    $region12: #{tpu_custom_call.1} parent=1 // pred_region
      _
    $region13: #{tpu_custom_call.1} parent=1 // pred_fallthru
      _
    // Predicated region
    $region14: #{tpu_custom_call.1} parent=1 // pred_check
      _
    $region15: #{tpu_custom_call.1} parent=1 // pred_check_branch
      %24 = sbr.rel (0) target = $region17
    $region16: #{tpu_custom_call.1} parent=1 // pred_region
      _
    $region17: #{tpu_custom_call.1} parent=1 // pred_fallthru
      _
    // Predicated region
    $region18: #{tpu_custom_call.1} parent=1 // pred_check
      _
    $region19: #{tpu_custom_call.1} parent=1 // pred_check_branch
      %26 = sbr.rel (0) target = $region21
    $region20: #{tpu_custom_call.1} parent=1 // pred_region
      _
    $region21: #{tpu_custom_call.1} parent=1 // pred_fallthru
      _
    // Predicated region
    $region22: #{tpu_custom_call.1} parent=1 // pred_check
      _
    $region23: #{tpu_custom_call.1} parent=1 // pred_check_branch
      %28 = sbr.rel (0) target = $region25
    $region24: #{tpu_custom_call.1} parent=1 // pred_region
      _
    $region25: #{tpu_custom_call.1} parent=1 // pred_fallthru
      _
    // Predicated region
    $region26: #{tpu_custom_call.1} parent=1 // pred_check
      _
    $region27: #{tpu_custom_call.1} parent=1 // pred_check_branch
      %30 = sbr.rel (0) target = $region29
    $region28: #{tpu_custom_call.1} parent=1 // pred_region
      _
    $region29: #{tpu_custom_call.1} parent=1 // pred_fallthru
      _
    // Predicated region
    $region30: #{tpu_custom_call.1} parent=1 // pred_check
      _
    $region31: #{tpu_custom_call.1} parent=1 // pred_check_branch
      %32 = sbr.rel (0) target = $region33
    $region32: #{tpu_custom_call.1} parent=1 // pred_region
      _
    $region33: #{tpu_custom_call.1} parent=1 // pred_fallthru
      _
    // Predicated region
    $region34: #{tpu_custom_call.1} parent=1 // pred_check
      _
    $region35: #{tpu_custom_call.1} parent=1 // pred_check_branch
      %34 = sbr.rel (0) target = $region37
    $region36: #{tpu_custom_call.1} parent=1 // pred_region
      _
    $region37: #{tpu_custom_call.1} parent=1 // pred_fallthru
      _
    %v35 = vld [vmem:[%s0] sm:$0xff]
    %v36 = vld [vmem:[%s0 + $0x8] sm:$0xff]
    %v37 = vld [vmem:[%s0 + $0x10] sm:$0xff]
    %v38 = vld [vmem:[%s0 + $0x18] sm:$0xff]
    %v39 = vld [vmem:[%s0 + $0x20] sm:$0xff]
    %v40 = vld [vmem:[%s0 + $0x28] sm:$0xff]
    %v41 = vld [vmem:[%s0 + $0x30] sm:$0xff]
    %v42 = vld [vmem:[%s0 + $0x38] sm:$0xff]
    %v43 = vld [vmem:[%s0 + $0x40] sm:$0xff]
    %v44 = vld [vmem:[%s0 + $0x48] sm:$0xff]
    %v45 = vld [vmem:[%s0 + $0x50] sm:$0xff]
    %v46 = vld [vmem:[%s0 + $0x58] sm:$0xff]
    %v47 = vld [vmem:[%s1] sm:$0xff]
    %v48 = vld [vmem:[%s1 + $0x8] sm:$0xff]
    %v49 = vld [vmem:[%s1 + $0x10] sm:$0xff]
    %v50 = vld [vmem:[%s1 + $0x18] sm:$0xff]
    %v51 = vld [vmem:[%s1 + $0x20] sm:$0xff]
    %v52 = vld [vmem:[%s1 + $0x28] sm:$0xff]
    %v53 = vld [vmem:[%s1 + $0x30] sm:$0xff]
    %v54 = vld [vmem:[%s1 + $0x38] sm:$0xff]
    %v55 = vld [vmem:[%s1 + $0x40] sm:$0xff]
    %v56 = vld [vmem:[%s1 + $0x48] sm:$0xff]
    %v57 = vld [vmem:[%s1 + $0x50] sm:$0xff]
    %v58 = vld [vmem:[%s1 + $0x58] sm:$0xff]
    %v59 = vld [vmem:[%s2] sm:$0xff]
    %v60 = vld [vmem:[%s3] sm:$0xff]
    %v61 = vld [vmem:[%s4] sm:$0x1]
    %vm62 = vcmask 64512
    %v64 = vsel %vm62, %v47, 0
    %v67 = vsel %vm62, %v48, 0
    %v70 = vsel %vm62, %v49, 0
    %v73 = vsel %vm62, %v50, 0
    %v76 = vsel %vm62, %v51, 0
    %v79 = vsel %vm62, %v52, 0
    %v82 = vsel %vm62, %v53, 0
    %v85 = vsel %vm62, %v54, 0
    %v88 = vsel %vm62, %v55, 0
    %v91 = vsel %vm62, %v56, 0
    %v94 = vsel %vm62, %v57, 0
    %v97 = vsel %vm62, %v58, 0
    %99 = vmatprep.subr.mxu0 0.0
    %100 = vmatpush1.msra.mxu0 0.0
    %101 = vmatprep.subr.mxu0 0.0
    %102 = vmatpush1.msra.mxu0 0.0
    %103 = vmatprep.subr.mxu0 0.0
    %104 = vmatpush1.msra.mxu0 0.0
    %105 = vmatprep.subr.mxu0 0.0
    %106 = vmatpush1.msra.mxu0 0.0
    %107 = vmatprep.subr.mxu0 0.0
    %108 = vmatpush1.msra.mxu0 0.0
    %109 = vmatprep.subr.mxu0 0.0
    %110 = vmatpush1.msra.mxu0 0.0
    %111 = vmatprep.subr.mxu0 0.0
    %112 = vmatpush1.msra.mxu0 0.0
    %113 = vmatprep.subr.mxu0 0.0
    %114 = vmatpush1.msra.mxu0 0.0
    %115 = vmatprep.subr.mxu0 0.0
    %116 = vmatpush1.msra.mxu0 0.0
    %117 = vmatprep.subr.mxu0 0.0
    %118 = vmatpush1.msra.mxu0 0.0
    %119 = vmatprep.subr.mxu0 0.0
    %120 = vmatpush1.msra.mxu0 0.0
    %121 = vmatprep.subr.mxu0 0.0
    %122 = vmatpush1.msra.mxu0 0.0
    %123 = vmatprep.subr.mxu0 0.0
    %124 = vmatpush1.msra.mxu0 0.0
    %125 = vmatprep.subr.mxu0 0.0
    %126 = vmatpush1.msra.mxu0 0.0
    %127 = vmatprep.subr.mxu0 0.0
    %128 = vmatpush1.msra.mxu0 0.0
    %129 = vmatprep.subr.mxu0 0.0
    %130 = vmatpush1.msra.mxu0 %v60
    %131 = vmatprep.subr.mxu0 0.0
    %132 = vmatpush2.msra.mxu0 0.0
    %133 = vmatprep.subr.mxu0 0.0
    %134 = vmatpush2.msra.mxu0 0.0
    %135 = vmatprep.subr.mxu0 0.0
    %136 = vmatpush2.msra.mxu0 0.0
    %137 = vmatprep.subr.mxu0 0.0
    %138 = vmatpush2.msra.mxu0 0.0
    %139 = vmatprep.subr.mxu0 0.0
    %140 = vmatpush2.msra.mxu0 0.0
    %141 = vmatprep.subr.mxu0 0.0
    %142 = vmatpush2.msra.mxu0 0.0
    %143 = vmatprep.subr.mxu0 0.0
    %144 = vmatpush2.msra.mxu0 0.0
    %145 = vmatprep.subr.mxu0 0.0
    %146 = vmatpush2.msra.mxu0 0.0
    %147 = vmatprep.subr.mxu0 0.0
    %148 = vmatpush2.msra.mxu0 0.0
    %149 = vmatprep.subr.mxu0 0.0
    %150 = vmatpush2.msra.mxu0 0.0
    %151 = vmatprep.subr.mxu0 0.0
    %152 = vmatpush2.msra.mxu0 0.0
    %153 = vmatprep.subr.mxu0 0.0
    %154 = vmatpush2.msra.mxu0 0.0
    %155 = vmatprep.subr.mxu0 0.0
    %156 = vmatpush2.msra.mxu0 0.0
    %157 = vmatprep.subr.mxu0 0.0
    %158 = vmatpush2.msra.mxu0 0.0
    %159 = vmatprep.subr.mxu0 0.0
    %160 = vmatpush2.msra.mxu0 0.0
    %161 = vmatprep.subr.mxu0 0.0
    %162 = vmatpush2.msra.mxu0 0.0
    %163 = vmatprep.mubr.f32.mxu0 0.0
    %164 = vmatmul.mubr.f32.gmra.mxu0 %v64
    %v165 = vpop.f32.mrf.mxu0
    %v166 = vadd.f32 0.0, %v165
    %v167 = vpop.f32.mrf.mxu0
    %168 = vmatprep.mubr.f32.mxu0 0.0
    %169 = vmatmul.mubr.f32.gmra.mxu0 %v67
    %v170 = vpop.f32.mrf.mxu0
    %v171 = vadd.f32 0.0, %v170
    %v172 = vpop.f32.mrf.mxu0
    %173 = vmatprep.mubr.f32.mxu0 0.0
    %174 = vmatmul.mubr.f32.gmra.mxu0 %v70
    %v175 = vpop.f32.mrf.mxu0
    %v176 = vadd.f32 0.0, %v175
    %v177 = vpop.f32.mrf.mxu0
    %178 = vmatprep.mubr.f32.mxu0 0.0
    %179 = vmatmul.mubr.f32.gmra.mxu0 %v73
    %v180 = vpop.f32.mrf.mxu0
    %v181 = vadd.f32 0.0, %v180
    %v182 = vpop.f32.mrf.mxu0
    %183 = vmatprep.mubr.f32.mxu0 0.0
    %184 = vmatmul.mubr.f32.gmra.mxu0 %v76
    %v185 = vpop.f32.mrf.mxu0
    %v186 = vadd.f32 0.0, %v185
    %v187 = vpop.f32.mrf.mxu0
    %188 = vmatprep.mubr.f32.mxu0 0.0
    %189 = vmatmul.mubr.f32.gmra.mxu0 %v79
    %v190 = vpop.f32.mrf.mxu0
    %v191 = vadd.f32 0.0, %v190
    %v192 = vpop.f32.mrf.mxu0
    %193 = vmatprep.mubr.f32.mxu0 0.0
    %194 = vmatmul.mubr.f32.gmra.mxu0 %v82
    %v195 = vpop.f32.mrf.mxu0
    %v196 = vadd.f32 0.0, %v195
    %v197 = vpop.f32.mrf.mxu0
    %198 = vmatprep.mubr.f32.mxu0 0.0
    %199 = vmatmul.mubr.f32.gmra.mxu0 %v85
    %v200 = vpop.f32.mrf.mxu0
    %v201 = vadd.f32 0.0, %v200
    %v202 = vpop.f32.mrf.mxu0
    %203 = vmatprep.mubr.f32.mxu0 0.0
    %204 = vmatmul.mubr.f32.gmra.mxu0 %v88
    %v205 = vpop.f32.mrf.mxu0
    %v206 = vadd.f32 0.0, %v205
    %v207 = vpop.f32.mrf.mxu0
    %208 = vmatprep.mubr.f32.mxu0 0.0
    %209 = vmatmul.mubr.f32.gmra.mxu0 %v91
    %v210 = vpop.f32.mrf.mxu0
    %v211 = vadd.f32 0.0, %v210
    %v212 = vpop.f32.mrf.mxu0
    %213 = vmatprep.mubr.f32.mxu0 0.0
    %214 = vmatmul.mubr.f32.gmra.mxu0 %v94
    %v215 = vpop.f32.mrf.mxu0
    %v216 = vadd.f32 0.0, %v215
    %v217 = vpop.f32.mrf.mxu0
    %218 = vmatprep.mubr.f32.mxu0 0.0
    %219 = vmatmul.mubr.f32.gmra.mxu0 %v97
    %v220 = vpop.f32.mrf.mxu0
    %v221 = vadd.f32 0.0, %v220
    %v222 = vpop.f32.mrf.mxu0
    %223 = vdwg.mxu0
    %v225 = vsel %vm62, %v35, 0
    %v228 = vsel %vm62, %v36, 0
    %v231 = vsel %vm62, %v37, 0
    %v234 = vsel %vm62, %v38, 0
    %v237 = vsel %vm62, %v39, 0
    %v240 = vsel %vm62, %v40, 0
    %v243 = vsel %vm62, %v41, 0
    %v246 = vsel %vm62, %v42, 0
    %v249 = vsel %vm62, %v43, 0
    %v252 = vsel %vm62, %v44, 0
    %v255 = vsel %vm62, %v45, 0
    %v258 = vsel %vm62, %v46, 0
    %260 = vmatprep.subr.mxu0 0.0
    %261 = vmatpush1.msra.mxu0 0.0
    %262 = vmatprep.subr.mxu0 0.0
    %263 = vmatpush1.msra.mxu0 0.0
    %264 = vmatprep.subr.mxu0 0.0
    %265 = vmatpush1.msra.mxu0 0.0
    %266 = vmatprep.subr.mxu0 0.0
    %267 = vmatpush1.msra.mxu0 0.0
    %268 = vmatprep.subr.mxu0 0.0
    %269 = vmatpush1.msra.mxu0 0.0
    %270 = vmatprep.subr.mxu0 0.0
    %271 = vmatpush1.msra.mxu0 0.0
    %272 = vmatprep.subr.mxu0 0.0
    %273 = vmatpush1.msra.mxu0 0.0
    %274 = vmatprep.subr.mxu0 0.0
    %275 = vmatpush1.msra.mxu0 0.0
    %276 = vmatprep.subr.mxu0 0.0
    %277 = vmatpush1.msra.mxu0 0.0
    %278 = vmatprep.subr.mxu0 0.0
    %279 = vmatpush1.msra.mxu0 0.0
    %280 = vmatprep.subr.mxu0 0.0
    %281 = vmatpush1.msra.mxu0 0.0
    %282 = vmatprep.subr.mxu0 0.0
    %283 = vmatpush1.msra.mxu0 0.0
    %284 = vmatprep.subr.mxu0 0.0
    %285 = vmatpush1.msra.mxu0 0.0
    %286 = vmatprep.subr.mxu0 0.0
    %287 = vmatpush1.msra.mxu0 0.0
    %288 = vmatprep.subr.mxu0 0.0
    %289 = vmatpush1.msra.mxu0 0.0
    %290 = vmatprep.subr.mxu0 0.0
    %291 = vmatpush1.msra.mxu0 %v59
    %292 = vmatprep.subr.mxu0 0.0
    %293 = vmatpush2.msra.mxu0 0.0
    %294 = vmatprep.subr.mxu0 0.0
    %295 = vmatpush2.msra.mxu0 0.0
    %296 = vmatprep.subr.mxu0 0.0
    %297 = vmatpush2.msra.mxu0 0.0
    %298 = vmatprep.subr.mxu0 0.0
    %299 = vmatpush2.msra.mxu0 0.0
    %300 = vmatprep.subr.mxu0 0.0
    %301 = vmatpush2.msra.mxu0 0.0
    %302 = vmatprep.subr.mxu0 0.0
    %303 = vmatpush2.msra.mxu0 0.0
    %304 = vmatprep.subr.mxu0 0.0
    %305 = vmatpush2.msra.mxu0 0.0
    %306 = vmatprep.subr.mxu0 0.0
    %307 = vmatpush2.msra.mxu0 0.0
    %308 = vmatprep.subr.mxu0 0.0
    %309 = vmatpush2.msra.mxu0 0.0
    %310 = vmatprep.subr.mxu0 0.0
    %311 = vmatpush2.msra.mxu0 0.0
    %312 = vmatprep.subr.mxu0 0.0
    %313 = vmatpush2.msra.mxu0 0.0
    %314 = vmatprep.subr.mxu0 0.0
    %315 = vmatpush2.msra.mxu0 0.0
    %316 = vmatprep.subr.mxu0 0.0
    %317 = vmatpush2.msra.mxu0 0.0
    %318 = vmatprep.subr.mxu0 0.0
    %319 = vmatpush2.msra.mxu0 0.0
    %320 = vmatprep.subr.mxu0 0.0
    %321 = vmatpush2.msra.mxu0 0.0
    %322 = vmatprep.subr.mxu0 0.0
    %323 = vmatpush2.msra.mxu0 0.0
    %324 = vmatprep.mubr.f32.mxu0 0.0
    %325 = vmatmul.mubr.f32.gmra.mxu0 %v225
    %v326 = vpop.f32.mrf.mxu0
    %v327 = vadd.f32 %v166, %v326
    %v328 = vpop.f32.mrf.mxu0
    %329 = vmatprep.mubr.f32.mxu0 0.0
    %330 = vmatmul.mubr.f32.gmra.mxu0 %v228
    %v331 = vpop.f32.mrf.mxu0
    %v332 = vadd.f32 %v171, %v331
    %v333 = vpop.f32.mrf.mxu0
    %334 = vmatprep.mubr.f32.mxu0 0.0
    %335 = vmatmul.mubr.f32.gmra.mxu0 %v231
    %v336 = vpop.f32.mrf.mxu0
    %v337 = vadd.f32 %v176, %v336
    %v338 = vpop.f32.mrf.mxu0
    %339 = vmatprep.mubr.f32.mxu0 0.0
    %340 = vmatmul.mubr.f32.gmra.mxu0 %v234
    %v341 = vpop.f32.mrf.mxu0
    %v342 = vadd.f32 %v181, %v341
    %v343 = vpop.f32.mrf.mxu0
    %344 = vmatprep.mubr.f32.mxu0 0.0
    %345 = vmatmul.mubr.f32.gmra.mxu0 %v237
    %v346 = vpop.f32.mrf.mxu0
    %v347 = vadd.f32 %v186, %v346
    %v348 = vpop.f32.mrf.mxu0
    %349 = vmatprep.mubr.f32.mxu0 0.0
    %350 = vmatmul.mubr.f32.gmra.mxu0 %v240
    %v351 = vpop.f32.mrf.mxu0
    %v352 = vadd.f32 %v191, %v351
    %v353 = vpop.f32.mrf.mxu0
    %354 = vmatprep.mubr.f32.mxu0 0.0
    %355 = vmatmul.mubr.f32.gmra.mxu0 %v243
    %v356 = vpop.f32.mrf.mxu0
    %v357 = vadd.f32 %v196, %v356
    %v358 = vpop.f32.mrf.mxu0
    %359 = vmatprep.mubr.f32.mxu0 0.0
    %360 = vmatmul.mubr.f32.gmra.mxu0 %v246
    %v361 = vpop.f32.mrf.mxu0
    %v362 = vadd.f32 %v201, %v361
    %v363 = vpop.f32.mrf.mxu0
    %364 = vmatprep.mubr.f32.mxu0 0.0
    %365 = vmatmul.mubr.f32.gmra.mxu0 %v249
    %v366 = vpop.f32.mrf.mxu0
    %v367 = vadd.f32 %v206, %v366
    %v368 = vpop.f32.mrf.mxu0
    %369 = vmatprep.mubr.f32.mxu0 0.0
    %370 = vmatmul.mubr.f32.gmra.mxu0 %v252
    %v371 = vpop.f32.mrf.mxu0
    %v372 = vadd.f32 %v211, %v371
    %v373 = vpop.f32.mrf.mxu0
    %374 = vmatprep.mubr.f32.mxu0 0.0
    %375 = vmatmul.mubr.f32.gmra.mxu0 %v255
    %v376 = vpop.f32.mrf.mxu0
    %v377 = vadd.f32 %v216, %v376
    %v378 = vpop.f32.mrf.mxu0
    %379 = vmatprep.mubr.f32.mxu0 0.0
    %380 = vmatmul.mubr.f32.gmra.mxu0 %v258
    %v381 = vpop.f32.mrf.mxu0
    %v382 = vadd.f32 %v221, %v381
    %v383 = vpop.f32.mrf.mxu0
    %384 = vdwg.mxu0
    %v386 = vlaneseq
    %v387 = vshrl.u32 %v386, 7
    %v388 = vsub.s32 0, %v387
    %v389 = vrot.slane %v61, %v388
    %v391 = vadd.f32 %v327, %v389
    %v392 = vadd.f32 %v332, %v389
    %v393 = vadd.f32 %v337, %v389
    %v394 = vadd.f32 %v342, %v389
    %v395 = vadd.f32 %v347, %v389
    %v396 = vadd.f32 %v352, %v389
    %v397 = vadd.f32 %v357, %v389
    %v398 = vadd.f32 %v362, %v389
    %v399 = vadd.f32 %v367, %v389
    %v400 = vadd.f32 %v372, %v389
    %v401 = vadd.f32 %v377, %v389
    %v402 = vadd.f32 %v382, %v389
    %v403 = vmax.f32 %v391, 0.0
    %v404 = vmax.f32 %v392, 0.0
    %v405 = vmax.f32 %v393, 0.0
    %v406 = vmax.f32 %v394, 0.0
    %v407 = vmax.f32 %v395, 0.0
    %v408 = vmax.f32 %v396, 0.0
    %v409 = vmax.f32 %v397, 0.0
    %v410 = vmax.f32 %v398, 0.0
    %v411 = vmax.f32 %v399, 0.0
    %v412 = vmax.f32 %v400, 0.0
    %v413 = vmax.f32 %v401, 0.0
    %v414 = vmax.f32 %v402, 0.0
    %v415 = vld [vmem:[%s5] sm:$0xff]
    %v416 = vld [vmem:[%s5 + $0x8] sm:$0xff]
    %v417 = vld [vmem:[%s5 + $0x10] sm:$0xff]
    %v418 = vld [vmem:[%s5 + $0x18] sm:$0xff]
    %v419 = vld [vmem:[%s6] sm:$0x1]
    %v421 = vlaneseq
    %v422 = vshrl.u32 %v421, 7
    %v423 = vsub.s32 0, %v422
    %v424 = vrot.slane %v419, %v423
    %vm426 = vcmask 261120
    %v428 = vsel %vm426, %v403, 0
    %v431 = vsel %vm426, %v404, 0
    %v434 = vsel %vm426, %v405, 0
    %v437 = vsel %vm426, %v406, 0
    %v440 = vsel %vm426, %v407, 0
    %v443 = vsel %vm426, %v408, 0
    %v446 = vsel %vm426, %v409, 0
    %v449 = vsel %vm426, %v410, 0
    %v452 = vsel %vm426, %v411, 0
    %v455 = vsel %vm426, %v412, 0
    %v458 = vsel %vm426, %v413, 0
    %v461 = vsel %vm426, %v414, 0
    %463 = vmatprep.subr.mxu0 0.0
    %464 = vmatpush1.msra.mxu0 0.0
    %465 = vmatprep.subr.mxu0 0.0
    %466 = vmatpush1.msra.mxu0 0.0
    %467 = vmatprep.subr.mxu0 0.0
    %468 = vmatpush1.msra.mxu0 0.0
    %469 = vmatprep.subr.mxu0 0.0
    %470 = vmatpush1.msra.mxu0 0.0
    %471 = vmatprep.subr.mxu0 0.0
    %472 = vmatpush1.msra.mxu0 0.0
    %473 = vmatprep.subr.mxu0 0.0
    %474 = vmatpush1.msra.mxu0 0.0
    %475 = vmatprep.subr.mxu0 0.0
    %476 = vmatpush1.msra.mxu0 0.0
    %477 = vmatprep.subr.mxu0 0.0
    %478 = vmatpush1.msra.mxu0 0.0
    %479 = vmatprep.subr.mxu0 0.0
    %480 = vmatpush1.msra.mxu0 0.0
    %481 = vmatprep.subr.mxu0 0.0
    %482 = vmatpush1.msra.mxu0 0.0
    %483 = vmatprep.subr.mxu0 0.0
    %484 = vmatpush1.msra.mxu0 0.0
    %485 = vmatprep.subr.mxu0 0.0
    %486 = vmatpush1.msra.mxu0 0.0
    %487 = vmatprep.subr.mxu0 0.0
    %488 = vmatpush1.msra.mxu0 %v418
    %489 = vmatprep.subr.mxu0 0.0
    %490 = vmatpush1.msra.mxu0 %v417
    %491 = vmatprep.subr.mxu0 0.0
    %492 = vmatpush1.msra.mxu0 %v416
    %493 = vmatprep.subr.mxu0 0.0
    %494 = vmatpush1.msra.mxu0 %v415
    %495 = vmatprep.subr.mxu0 0.0
    %496 = vmatpush2.msra.mxu0 0.0
    %497 = vmatprep.subr.mxu0 0.0
    %498 = vmatpush2.msra.mxu0 0.0
    %499 = vmatprep.subr.mxu0 0.0
    %500 = vmatpush2.msra.mxu0 0.0
    %501 = vmatprep.subr.mxu0 0.0
    %502 = vmatpush2.msra.mxu0 0.0
    %503 = vmatprep.subr.mxu0 0.0
    %504 = vmatpush2.msra.mxu0 0.0
    %505 = vmatprep.subr.mxu0 0.0
    %506 = vmatpush2.msra.mxu0 0.0
    %507 = vmatprep.subr.mxu0 0.0
    %508 = vmatpush2.msra.mxu0 0.0
    %509 = vmatprep.subr.mxu0 0.0
    %510 = vmatpush2.msra.mxu0 0.0
    %511 = vmatprep.subr.mxu0 0.0
    %512 = vmatpush2.msra.mxu0 0.0
    %513 = vmatprep.subr.mxu0 0.0
    %514 = vmatpush2.msra.mxu0 0.0
    %515 = vmatprep.subr.mxu0 0.0
    %516 = vmatpush2.msra.mxu0 0.0
    %517 = vmatprep.subr.mxu0 0.0
    %518 = vmatpush2.msra.mxu0 0.0
    %519 = vmatprep.subr.mxu0 0.0
    %520 = vmatpush2.msra.mxu0 0.0
    %521 = vmatprep.subr.mxu0 0.0
    %522 = vmatpush2.msra.mxu0 0.0
    %523 = vmatprep.subr.mxu0 0.0
    %524 = vmatpush2.msra.mxu0 0.0
    %525 = vmatprep.subr.mxu0 0.0
    %526 = vmatpush2.msra.mxu0 0.0
    %527 = vmatprep.mubr.f32.mxu0 0.0
    %528 = vmatmul.mubr.f32.gmra.mxu0 %v428
    %v529 = vpop.f32.mrf.mxu0
    %v530 = vadd.f32 %v424, %v529
    %v531 = vpop.f32.mrf.mxu0
    %532 = vmatprep.mubr.f32.mxu0 0.0
    %533 = vmatmul.mubr.f32.gmra.mxu0 %v431
    %v534 = vpop.f32.mrf.mxu0
    %v535 = vadd.f32 %v424, %v534
    %v536 = vpop.f32.mrf.mxu0
    %537 = vmatprep.mubr.f32.mxu0 0.0
    %538 = vmatmul.mubr.f32.gmra.mxu0 %v434
    %v539 = vpop.f32.mrf.mxu0
    %v540 = vadd.f32 %v424, %v539
    %v541 = vpop.f32.mrf.mxu0
    %542 = vmatprep.mubr.f32.mxu0 0.0
    %543 = vmatmul.mubr.f32.gmra.mxu0 %v437
    %v544 = vpop.f32.mrf.mxu0
    %v545 = vadd.f32 %v424, %v544
    %v546 = vpop.f32.mrf.mxu0
    %547 = vmatprep.mubr.f32.mxu0 0.0
    %548 = vmatmul.mubr.f32.gmra.mxu0 %v440
    %v549 = vpop.f32.mrf.mxu0
    %v550 = vadd.f32 %v424, %v549
    %v551 = vpop.f32.mrf.mxu0
    %552 = vmatprep.mubr.f32.mxu0 0.0
    %553 = vmatmul.mubr.f32.gmra.mxu0 %v443
    %v554 = vpop.f32.mrf.mxu0
    %v555 = vadd.f32 %v424, %v554
    %v556 = vpop.f32.mrf.mxu0
    %557 = vmatprep.mubr.f32.mxu0 0.0
    %558 = vmatmul.mubr.f32.gmra.mxu0 %v446
    %v559 = vpop.f32.mrf.mxu0
    %v560 = vadd.f32 %v424, %v559
    %v561 = vpop.f32.mrf.mxu0
    %562 = vmatprep.mubr.f32.mxu0 0.0
    %563 = vmatmul.mubr.f32.gmra.mxu0 %v449
    %v564 = vpop.f32.mrf.mxu0
    %v565 = vadd.f32 %v424, %v564
    %v566 = vpop.f32.mrf.mxu0
    %567 = vmatprep.mubr.f32.mxu0 0.0
    %568 = vmatmul.mubr.f32.gmra.mxu0 %v452
    %v569 = vpop.f32.mrf.mxu0
    %v570 = vadd.f32 %v424, %v569
    %v571 = vpop.f32.mrf.mxu0
    %572 = vmatprep.mubr.f32.mxu0 0.0
    %573 = vmatmul.mubr.f32.gmra.mxu0 %v455
    %v574 = vpop.f32.mrf.mxu0
    %v575 = vadd.f32 %v424, %v574
    %v576 = vpop.f32.mrf.mxu0
    %577 = vmatprep.mubr.f32.mxu0 0.0
    %578 = vmatmul.mubr.f32.gmra.mxu0 %v458
    %v579 = vpop.f32.mrf.mxu0
    %v580 = vadd.f32 %v424, %v579
    %v581 = vpop.f32.mrf.mxu0
    %582 = vmatprep.mubr.f32.mxu0 0.0
    %583 = vmatmul.mubr.f32.gmra.mxu0 %v461
    %v584 = vpop.f32.mrf.mxu0
    %v585 = vadd.f32 %v424, %v584
    %v586 = vpop.f32.mrf.mxu0
    %587 = vdwg.mxu0
    %v588 = vmax.f32 %v530, 0.0
    %v589 = vmax.f32 %v535, 0.0
    %v590 = vmax.f32 %v540, 0.0
    %v591 = vmax.f32 %v545, 0.0
    %v592 = vmax.f32 %v550, 0.0
    %v593 = vmax.f32 %v555, 0.0
    %v594 = vmax.f32 %v560, 0.0
    %v595 = vmax.f32 %v565, 0.0
    %v596 = vmax.f32 %v570, 0.0
    %v597 = vmax.f32 %v575, 0.0
    %v598 = vmax.f32 %v580, 0.0
    %v599 = vmax.f32 %v585, 0.0
    %v600 = vld [vmem:[%s7] sm:$0x1]
    %v601 = vld [vmem:[#allocation2] sm:$0x1]
    %v603 = vlaneseq
    %v604 = vshrl.u32 %v603, 7
    %v605 = vsub.s32 0, %v604
    %v606 = vrot.slane %v600, %v605
    %v608 = vmul.f32 %v588, %v606
    %v609 = vmul.f32 %v589, %v606
    %v610 = vmul.f32 %v590, %v606
    %v611 = vmul.f32 %v591, %v606
    %v612 = vmul.f32 %v592, %v606
    %v613 = vmul.f32 %v593, %v606
    %v614 = vmul.f32 %v594, %v606
    %v615 = vmul.f32 %v595, %v606
    %v616 = vmul.f32 %v596, %v606
    %v617 = vmul.f32 %v597, %v606
    %v618 = vmul.f32 %v598, %v606
    %v619 = vmul.f32 %v599, %v606
    %v620 = vsel %vm426, %v608, 0.0
    %621 = vadd.xlane.f32.xlu0 %v620
    %v622 = vpop.xlane.xlu0 %621
    %v623 = vsel %vm426, %v609, 0.0
    %624 = vadd.xlane.f32.xlu0 %v623
    %v625 = vpop.xlane.xlu0 %624
    %v626 = vsel %vm426, %v610, 0.0
    %627 = vadd.xlane.f32.xlu0 %v626
    %v628 = vpop.xlane.xlu0 %627
    %v629 = vsel %vm426, %v611, 0.0
    %630 = vadd.xlane.f32.xlu0 %v629
    %v631 = vpop.xlane.xlu0 %630
    %v632 = vsel %vm426, %v612, 0.0
    %633 = vadd.xlane.f32.xlu0 %v632
    %v634 = vpop.xlane.xlu0 %633
    %v635 = vsel %vm426, %v613, 0.0
    %636 = vadd.xlane.f32.xlu0 %v635
    %v637 = vpop.xlane.xlu0 %636
    %v638 = vsel %vm426, %v614, 0.0
    %639 = vadd.xlane.f32.xlu0 %v638
    %v640 = vpop.xlane.xlu0 %639
    %v641 = vsel %vm426, %v615, 0.0
    %642 = vadd.xlane.f32.xlu0 %v641
    %v643 = vpop.xlane.xlu0 %642
    %v644 = vsel %vm426, %v616, 0.0
    %645 = vadd.xlane.f32.xlu0 %v644
    %v646 = vpop.xlane.xlu0 %645
    %v647 = vsel %vm426, %v617, 0.0
    %648 = vadd.xlane.f32.xlu0 %v647
    %v649 = vpop.xlane.xlu0 %648
    %v650 = vsel %vm426, %v618, 0.0
    %651 = vadd.xlane.f32.xlu0 %v650
    %v652 = vpop.xlane.xlu0 %651
    %v653 = vsel %vm426, %v619, 0.0
    %654 = vadd.xlane.f32.xlu0 %v653
    %v655 = vpop.xlane.xlu0 %654
    %v657 = vlaneseq
    %v658 = vshrl.u32 %v657, 7
    %v659 = vsub.s32 0, %v658
    %v660 = vrot.slane %v601, %v659
    %v662 = vadd.f32 %v622, %v660
    %v663 = vadd.f32 %v625, %v660
    %v664 = vadd.f32 %v628, %v660
    %v665 = vadd.f32 %v631, %v660
    %v666 = vadd.f32 %v634, %v660
    %v667 = vadd.f32 %v637, %v660
    %v668 = vadd.f32 %v640, %v660
    %v669 = vadd.f32 %v643, %v660
    %v670 = vadd.f32 %v646, %v660
    %v671 = vadd.f32 %v649, %v660
    %v672 = vadd.f32 %v652, %v660
    %v673 = vadd.f32 %v655, %v660
    %686 = vset.pattern.permute.xlu0 0
    %687 = vperm.xlu0 %686, %v662
    %v688 = vpop.permute.xlu0 %687
    %689 = vset.pattern.permute.xlu0 0
    %690 = vperm.xlu0 %689, %v663
    %v691 = vpop.permute.xlu0 %690
    %692 = vset.pattern.permute.xlu0 0
    %693 = vperm.xlu0 %692, %v664
    %v694 = vpop.permute.xlu0 %693
    %695 = vset.pattern.permute.xlu0 0
    %696 = vperm.xlu0 %695, %v665
    %v697 = vpop.permute.xlu0 %696
    %698 = vset.pattern.permute.xlu0 0
    %699 = vperm.xlu0 %698, %v666
    %v700 = vpop.permute.xlu0 %699
    %701 = vset.pattern.permute.xlu0 0
    %702 = vperm.xlu0 %701, %v667
    %v703 = vpop.permute.xlu0 %702
    %704 = vset.pattern.permute.xlu0 0
    %705 = vperm.xlu0 %704, %v668
    %v706 = vpop.permute.xlu0 %705
    %707 = vset.pattern.permute.xlu0 0
    %708 = vperm.xlu0 %707, %v669
    %v709 = vpop.permute.xlu0 %708
    %710 = vset.pattern.permute.xlu0 0
    %711 = vperm.xlu0 %710, %v670
    %v712 = vpop.permute.xlu0 %711
    %713 = vset.pattern.permute.xlu0 0
    %714 = vperm.xlu0 %713, %v671
    %v715 = vpop.permute.xlu0 %714
    %716 = vset.pattern.permute.xlu0 0
    %717 = vperm.xlu0 %716, %v672
    %v718 = vpop.permute.xlu0 %717
    %719 = vset.pattern.permute.xlu0 0
    %720 = vperm.xlu0 %719, %v673
    %v721 = vpop.permute.xlu0 %720
    %v722 = vlaneseq
    %v723 = vand.u32 %v722, 127
    %v724 = vlaneseq
    %v725 = vshrl.u32 %v724, 7
    %v726 = vsub.s32 %v723, %v725
    %v727 = vrot.slane %v688, %v726
    %v728 = vadd.s32 %v723, 4294967288
    %v729 = vlaneseq
    %v730 = vshrl.u32 %v729, 7
    %v731 = vsub.s32 %v728, %v730
    %v732 = vrot.slane %v691, %v731
    %vm733 = vcmask 130112
    %v734 = vsel %vm733, %v732, %v727
    %v735 = vadd.s32 %v723, 4294967280
    %v736 = vlaneseq
    %v737 = vshrl.u32 %v736, 7
    %v738 = vsub.s32 %v735, %v737
    %v739 = vrot.slane %v694, %v738
    %vm740 = vcmask 195712
    %v741 = vsel %vm740, %v739, %v734
    %v742 = vadd.s32 %v723, 4294967272
    %v743 = vlaneseq
    %v744 = vshrl.u32 %v743, 7
    %v745 = vsub.s32 %v742, %v744
    %v746 = vrot.slane %v697, %v745
    %vm747 = vcmask 261312
    %v748 = vsel %vm747, %v746, %v741
    %v749 = vadd.s32 %v723, 4294967264
    %v750 = vlaneseq
    %v751 = vshrl.u32 %v750, 7
    %v752 = vsub.s32 %v749, %v751
    %v753 = vrot.slane %v700, %v752
    %vm754 = vcmask 326912
    %v755 = vsel %vm754, %v753, %v748
    %v756 = vadd.s32 %v723, 4294967256
    %v757 = vlaneseq
    %v758 = vshrl.u32 %v757, 7
    %v759 = vsub.s32 %v756, %v758
    %v760 = vrot.slane %v703, %v759
    %vm761 = vcmask 392512
    %v762 = vsel %vm761, %v760, %v755
    %v763 = vadd.s32 %v723, 4294967248
    %v764 = vlaneseq
    %v765 = vshrl.u32 %v764, 7
    %v766 = vsub.s32 %v763, %v765
    %v767 = vrot.slane %v706, %v766
    %vm768 = vcmask 458112
    %v769 = vsel %vm768, %v767, %v762
    %v770 = vadd.s32 %v723, 4294967240
    %v771 = vlaneseq
    %v772 = vshrl.u32 %v771, 7
    %v773 = vsub.s32 %v770, %v772
    %v774 = vrot.slane %v709, %v773
    %vm775 = vcmask 523712
    %v776 = vsel %vm775, %v774, %v769
    %v777 = vadd.s32 %v723, 4294967232
    %v778 = vlaneseq
    %v779 = vshrl.u32 %v778, 7
    %v780 = vsub.s32 %v777, %v779
    %v781 = vrot.slane %v712, %v780
    %vm782 = vcmask 589312
    %v783 = vsel %vm782, %v781, %v776
    %v784 = vadd.s32 %v723, 4294967224
    %v785 = vlaneseq
    %v786 = vshrl.u32 %v785, 7
    %v787 = vsub.s32 %v784, %v786
    %v788 = vrot.slane %v715, %v787
    %vm789 = vcmask 654912
    %v790 = vsel %vm789, %v788, %v783
    %v791 = vadd.s32 %v723, 4294967216
    %v792 = vlaneseq
    %v793 = vshrl.u32 %v792, 7
    %v794 = vsub.s32 %v791, %v793
    %v795 = vrot.slane %v718, %v794
    %vm796 = vcmask 720512
    %v797 = vsel %vm796, %v795, %v790
    %v798 = vadd.s32 %v723, 4294967208
    %v799 = vlaneseq
    %v800 = vshrl.u32 %v799, 7
    %v801 = vsub.s32 %v798, %v800
    %v802 = vrot.slane %v721, %v801
    %vm803 = vcmask 786112
    %v804 = vsel %vm803, %v802, %v797
    %vm806 = vcmask 778240
    %807 = vst.msk [vmem:[#allocation3] sm:$0x1] %vm806, %v804
    // Predicated region
    $region38: #{tpu_custom_call.1} parent=1 // pred_check
      _
    $region39: #{tpu_custom_call.1} parent=1 // pred_check_branch
      %809 = sbr.rel (0) target = $region41
    $region40: #{tpu_custom_call.1} parent=1 // pred_region
      %s811 = ssub.s32 16, 16
      %812 = vsyncadd [#allocation4], %s811
      %s814 = sshll.u32 [#allocation3], 4
      %s815 = int_to_ptr.vmem [resolvable:$true] %s814
      %817 = dma.vmem_to_hbm [thread:$0]  %s815, 16, %s9, [#allocation4]
    $region41: #{tpu_custom_call.1} parent=1 // pred_fallthru
      _
    // Predicated region
    $region42: #{tpu_custom_call.1} parent=1 // pred_check
      _
    $region43: #{tpu_custom_call.1} parent=1 // pred_check_branch
      %819 = sbr.rel (0) target = $region45
    $region44: #{tpu_custom_call.1} parent=1 // pred_region
      %820 = dma.done [#allocation4], 16
    $region45: #{tpu_custom_call.1} parent=1 // pred_fallthru
      _
    %821 = vsyncpa [#allocation4], 1

</llo_original>
